<compile_context>
chip_gen: v6e
topology: v6e:2x2x1
jax: 0.10.0
libtpu: 0.0.40
codegen_flags: <defaults>
</compile_context>

<pallas_src>
import functools

import jax
import jax.numpy as jnp
from jax import lax
from jax.experimental import pallas as pl
from jax.experimental.pallas import tpu as pltpu


def _round_up(x, m):
    return ((x + m - 1) // m) * m


def _vmem_budget_bytes():
    """~75% of this chip's physical VMEM; conservative 48 MiB fallback (fits v7x)."""
    cap = 64 * 1024 * 1024
    try:
        info = pltpu.get_tpu_info()
        cap = int(getattr(info, "vmem_capacity_bytes", cap))
    except Exception:
        pass
    return min(int(cap * 0.75), 100 * 1024 * 1024)


def time_lstm_kernel(xp_ref, h0_ref, c0_ref, wa_ref, wd_ref, bd_ref,
                     out_ref, hf_ref, cf_ref, h_sc, c_sc,
                     *, chunk, hidden, seq_len, unroll):
    """One grid step = `chunk` timesteps of one batch tile.  hidden == H_pad."""
    H = hidden
    k = pl.program_id(1)          # time-chunk index (batch-tile axis is axis 0)

    # Initialize the carried state at the first time chunk of each batch tile.
    @pl.when(k == 0)
    def _init():
        h_sc[...] = h0_ref[...]
        c_sc[...] = c0_ref[...]

    # Grid-invariant weights: load (and widen if stored bf16) once per chunk,
    # hoisted out of the per-timestep loop.
    wa = wa_ref[...].astype(jnp.float32)      # (H, 4H)  W_all^T, per-gate padded
    wd = wd_ref[...].astype(jnp.float32)      # (H, H)   W_d^T
    bd = bd_ref[...]                          # (1, H)   W_d bias

    def step(t, carry):
        # Mask tail steps when seq is not divisible by the chunk size.
        @pl.when(k * chunk + t < seq_len)
        def _():
            h = h_sc[...]
            c = c_sc[...]
            xt = xp_ref[t].astype(jnp.float32)       # (b, 4H+128): gate preacts | ts
            ts = xt[:, 4 * H:4 * H + 1]              # (b, 1) timestamp column

            # Two MXU matmuls (block-diagonal weight is NOT fused: no zero MACs).
            zd = jnp.dot(c, wd, preferred_element_type=jnp.float32)   # W_d(c)
            za = jnp.dot(h, wa, preferred_element_type=jnp.float32)   # W_all(h)

            c_s1 = jnp.tanh(zd + bd)
            c_adj = c + c_s1 * (ts - 1.0)            # == (c - c_s1) + c_s1 * ts

            gates = za + xt[:, :4 * H]               # + U_all(x_t) + b_W + b_U (precomputed)
            f = jax.nn.sigmoid(gates[:, 0:H])
            i = jax.nn.sigmoid(gates[:, H:2 * H])
            o = jax.nn.sigmoid(gates[:, 2 * H:3 * H])
            c_tmp = jax.nn.sigmoid(gates[:, 3 * H:4 * H])   # sigmoid, as in reference

            c_new = f * c_adj + i * c_tmp
            h_sc[...] = o * jnp.tanh(c_new)
            c_sc[...] = c_new
            out_ref[t] = o.astype(out_ref.dtype)     # lane-dense (b, H) store
        return carry

    lax.fori_loop(0, chunk, step, 0, unroll=unroll)

    # Final state written once, on the last time chunk of this batch tile.
    @pl.when(k == pl.num_programs(1) - 1)
    def _fin():
        hf_ref[...] = h_sc[...]
        cf_ref[...] = c_sc[...]


def time_lstm_forward(x, timestamps, h0, c0, params, reverse=False,
                      max_chunk=128, batch_tile=None,
                      stream_bf16=True, weights_bf16=False, unroll=8):
    """x: (b, seq, E), timestamps: (b, seq), h0/c0: (b, H)."""
    b, seq, E = x.shape
    H = h0.shape[-1]
    f32 = jnp.float32
    stream_dtype = jnp.bfloat16 if stream_bf16 else f32
    weight_dtype = jnp.bfloat16 if weights_bf16 else f32

    H_pad = _round_up(H, 128)          # lane-aligned per-gate padding
    b_pad = _round_up(b, 8)            # sublane-aligned batch
    tb = b_pad if batch_tile is None else _round_up(min(batch_tile, b_pad), 8)
    while b_pad % tb:
        tb += 8
    nb = b_pad // tb
    XW = 4 * H_pad + 128               # 4 gate blocks + one lane block carrying ts

    # ---- VMEM budget -> chunk size T and the scoped vmem limit ----
    sbytes = jnp.dtype(stream_dtype).itemsize
    wbytes = jnp.dtype(weight_dtype).itemsize
    budget = _vmem_budget_bytes()
    fixed = (2 * (H_pad * 4 * H_pad + H_pad * H_pad) * wbytes   # weights (dbl-buffered)
             + 2 * H_pad * 4                                    # W_d bias
             + 4 * 2 * tb * H_pad * 4                           # h0/c0/hf/cf
             + 2 * tb * H_pad * 4)                              # h/c scratch
    per_step = 2 * tb * (XW + H_pad) * sbytes                   # xp + out, dbl-buffered
    T = int(max(1, min(seq, max_chunk, (budget - fixed) // per_step)))
    n_chunks = (seq + T - 1) // T
    S_pad = n_chunks * T

    # ---- glue: pad / repack weights once (per-gate padding keeps gate chunks
    #            at lane-aligned offsets g*H_pad) ----
    wa = params["W_all_w"].astype(f32)     # (4H, H)
    ua = params["U_all_w"].astype(f32)     # (4H, E)
    wd = params["W_d_w"].astype(f32)       # (H, H)
    ba = params["W_all_b"].astype(f32)     # (4H,)
    bu = params["U_all_b"].astype(f32)     # (4H,)
    bdb = params["W_d_b"].astype(f32)      # (H,)

    wa4 = jnp.zeros((4, H_pad, H_pad), f32).at[:, :H, :H].set(wa.reshape(4, H, H))
    wa_t = jnp.transpose(wa4, (2, 0, 1)).reshape(H_pad, 4 * H_pad).astype(weight_dtype)
    ua4 = jnp.zeros((4, H_pad, E), f32).at[:, :H, :].set(ua.reshape(4, H, E))
    ua_t = jnp.transpose(ua4, (2, 0, 1)).reshape(E, 4 * H_pad)
    wd_t = (jnp.zeros((H_pad, H_pad), f32).at[:H, :H].set(wd).T).astype(weight_dtype)

    bias_g = (jnp.zeros((4, H_pad), f32).at[:, :H].set((ba + bu).reshape(4, H))
              .reshape(1, 1, 4 * H_pad))
    bd_pad = jnp.zeros((1, H_pad), f32).at[0, :H].set(bdb)

    # ---- hoisted input projection: one big XLA matmul for all timesteps;
    #      timestamps folded into a spare lane block of the same slab ----
    x_t = jnp.transpose(x.astype(f32), (1, 0, 2))              # (seq, b, E)
    xp_v = jnp.einsum("sbe,eg->sbg", x_t, ua_t) + bias_g       # (seq, b, 4H_pad)

    xp = jnp.zeros((S_pad, b_pad, XW), f32)
    xp = xp.at[:seq, :b, :4 * H_pad].set(xp_v)
    xp = xp.at[:seq, :b, 4 * H_pad].set(jnp.transpose(timestamps.astype(f32)))
    xp = xp.astype(stream_dtype)

    h0_p = jnp.zeros((b_pad, H_pad), f32).at[:b, :H].set(h0.astype(f32))
    c0_p = jnp.zeros((b_pad, H_pad), f32).at[:b, :H].set(c0.astype(f32))

    out_shapes = (
        jax.ShapeDtypeStruct((S_pad, b_pad, H_pad), stream_dtype),   # per-step o gate
        jax.ShapeDtypeStruct((b_pad, H_pad), f32),                   # final h
        jax.ShapeDtypeStruct((b_pad, H_pad), f32),                   # final c
    )

    grid_spec = pltpu.PrefetchScalarGridSpec(
        num_scalar_prefetch=0,
        grid=(nb, n_chunks),                                         # (batch tiles, time chunks)
        in_specs=[
            pl.BlockSpec((T, tb, XW), lambda ib, k: (k, ib, 0)),     # xp (+ts) chunk
            pl.BlockSpec((tb, H_pad), lambda ib, k: (ib, 0)),        # h0
            pl.BlockSpec((tb, H_pad), lambda ib, k: (ib, 0)),        # c0
            pl.BlockSpec((H_pad, 4 * H_pad), lambda ib, k: (0, 0)),  # W_all^T
            pl.BlockSpec((H_pad, H_pad), lambda ib, k: (0, 0)),      # W_d^T
            pl.BlockSpec((1, H_pad), lambda ib, k: (0, 0)),          # W_d bias
        ],
        out_specs=[
            pl.BlockSpec((T, tb, H_pad), lambda ib, k: (k, ib, 0)),  # o-gate slab
            pl.BlockSpec((tb, H_pad), lambda ib, k: (ib, 0)),        # final h
            pl.BlockSpec((tb, H_pad), lambda ib, k: (ib, 0)),        # final c
        ],
        scratch_shapes=[
            pltpu.VMEM((tb, H_pad), f32),                            # h carry
            pltpu.VMEM((tb, H_pad), f32),                            # c carry
        ],
    )

    kernel = functools.partial(time_lstm_kernel, chunk=T, hidden=H_pad,
                               seq_len=seq, unroll=int(max(1, min(unroll, T))))

    outs_t, h_f, c_f = pl.pallas_call(
        kernel,
        out_shape=out_shapes,
        grid_spec=grid_spec,
        input_output_aliases={1: 1, 2: 2},     # h0 -> final h, c0 -> final c
        compiler_params=pltpu.CompilerParams(
            dimension_semantics=("parallel", "arbitrary"),   # batch ||, time serial
            vmem_limit_bytes=budget),
    )(xp, h0_p, c0_p, wa_t, wd_t, bd_pad)

    outputs = jnp.transpose(outs_t[:seq, :b, :H], (1, 0, 2)).astype(f32)  # (b, seq, H)
    if reverse:
        outputs = jnp.flip(outputs, axis=1)
    return outputs, (h_f[:b, :H], c_f[:b, :H])


def time_lstm_reference(x, timestamps, h0, c0, params):
    """Pure-JAX reference mirroring the PyTorch loop."""
    b, seq, E = x.shape
    H = h0.shape[-1]
    h, c = h0, c0
    outs_list = []
    for s in range(seq):
        c_s1 = jnp.tanh(c @ params["W_d_w"].T + params["W_d_b"])
        c_s2 = c_s1 * timestamps[:, s:s + 1]
        c_adj = (c - c_s1) + c_s2
        outs = (h @ params["W_all_w"].T + params["W_all_b"]
                + x[:, s] @ params["U_all_w"].T + params["U_all_b"])
        f = jax.nn.sigmoid(outs[:, 0:H])
        i = jax.nn.sigmoid(outs[:, H:2 * H])
        o = jax.nn.sigmoid(outs[:, 2 * H:3 * H])
        c_tmp = jax.nn.sigmoid(outs[:, 3 * H:4 * H])
        c = f * c_adj + i * c_tmp
        h = o * jnp.tanh(c)
        outs_list.append(o)
    return jnp.stack(outs_list, axis=1), (h, c)


if __name__ == "__main__":
    # Small shapes consistent with the module: (b, seq, input_size), hidden_size.
    B, SEQ, E, H = 2, 8, 16, 32

    key = jax.random.PRNGKey(0)
    keys = jax.random.split(key, 10)

    params = {
        "W_all_w": 0.1 * jax.random.normal(keys[0], (4 * H, H), jnp.float32),
        "W_all_b": 0.1 * jax.random.normal(keys[1], (4 * H,), jnp.float32),
        "U_all_w": 0.1 * jax.random.normal(keys[2], (4 * H, E), jnp.float32),
        "U_all_b": 0.1 * jax.random.normal(keys[3], (4 * H,), jnp.float32),
        "W_d_w": 0.1 * jax.random.normal(keys[4], (H, H), jnp.float32),
        "W_d_b": 0.1 * jax.random.normal(keys[5], (H,), jnp.float32),
    }

    x = jax.random.normal(keys[6], (B, SEQ, E), jnp.float32)
    timestamps = jax.random.uniform(keys[7], (B, SEQ), jnp.float32)
    h0 = jax.random.normal(keys[8], (B, H), jnp.float32)
    c0 = jax.random.normal(keys[9], (B, H), jnp.float32)

    ref_out, (ref_h, ref_c) = time_lstm_reference(x, timestamps, h0, c0, params)

    # Case 1: T=4 divides seq=8 -> 2 sequential chunks (exercises the h/c carry).
    outputs, (h_f, c_f) = time_lstm_forward(x, timestamps, h0, c0, params,
                                            max_chunk=4)
    jax.block_until_ready((outputs, h_f, c_f))
    assert outputs.shape == (B, SEQ, H)
    assert h_f.shape == (B, H) and c_f.shape == (B, H)
    assert jnp.allclose(outputs, ref_out, rtol=1e-2, atol=1e-2)
    assert jnp.allclose(h_f, ref_h, rtol=1e-2, atol=1e-2)
    assert jnp.allclose(c_f, ref_c, rtol=1e-2, atol=1e-2)

    # Case 2: T=3 does NOT divide seq=8 -> exercises the masked tail path.
    outputs2, (h_f2, c_f2) = time_lstm_forward(x, timestamps, h0, c0, params,
                                               max_chunk=3)
    jax.block_until_ready((outputs2, h_f2, c_f2))
    assert jnp.allclose(outputs2, ref_out, rtol=1e-2, atol=1e-2)
    assert jnp.allclose(h_f2, ref_h, rtol=1e-2, atol=1e-2)
    assert jnp.allclose(c_f2, ref_c, rtol=1e-2, atol=1e-2)

    print("KERNEL_OK")
</pallas_src>

<mosaic_0001>
module attributes {stable_mosaic.version = 11 : i64} {
  func.func @time_lstm_kernel(%arg0: i32, %arg1: i32, %arg2: memref<4x8x640xbf16, #tpu.memory_space<vmem>>, %arg3: memref<8x128xf32, #tpu.memory_space<vmem>>, %arg4: memref<8x128xf32, #tpu.memory_space<vmem>>, %arg5: memref<128x512xf32, #tpu.memory_space<vmem>>, %arg6: memref<128x128xf32, #tpu.memory_space<vmem>>, %arg7: memref<1x128xf32, #tpu.memory_space<vmem>>, %arg8: memref<4x8x128xbf16, #tpu.memory_space<vmem>>, %arg9: memref<8x128xf32, #tpu.memory_space<vmem>>, %arg10: memref<8x128xf32, #tpu.memory_space<vmem>>, %arg11: memref<8x128xf32, #tpu.memory_space<vmem>>, %arg12: memref<8x128xf32, #tpu.memory_space<vmem>>) attributes {dimension_semantics = [#tpu.dimension_semantics<parallel>, #tpu.dimension_semantics<arbitrary>], iteration_bounds = array<i64: 1, 2>, scalar_prefetch = 0 : i64, scratch_operands = 2 : i64, tpu.core_type = #tpu.core_type<tc>, window_params = [{transform_indices = @transform_0, window_bounds = array<i64: 4, 8, 640>}, {transform_indices = @transform_1, window_bounds = array<i64: 8, 128>}, {transform_indices = @transform_2, window_bounds = array<i64: 8, 128>}, {pipeline_mode = #tpu.pipeline_mode<synchronous>, transform_indices = @transform_3, window_bounds = array<i64: 128, 512>}, {pipeline_mode = #tpu.pipeline_mode<synchronous>, transform_indices = @transform_4, window_bounds = array<i64: 128, 128>}, {pipeline_mode = #tpu.pipeline_mode<synchronous>, transform_indices = @transform_5, window_bounds = array<i64: 1, 128>}, {transform_indices = @transform_6, window_bounds = array<i64: 4, 8, 128>}, {transform_indices = @transform_7, window_bounds = array<i64: 8, 128>}, {transform_indices = @transform_8, window_bounds = array<i64: 8, 128>}]} {
    %c0_i32 = arith.constant 0 : i32
    %0 = arith.cmpi eq, %arg1, %c0_i32 : i32
    %1 = arith.extui %0 : i1 to i32
    %c0_i32_0 = arith.constant 0 : i32
    %2 = arith.cmpi ne, %1, %c0_i32_0 : i32
    scf.if %2 {
      %c0_20 = arith.constant 0 : index
      %c0_21 = arith.constant 0 : index
      %29 = vector.load %arg3[%c0_20, %c0_21] : memref<8x128xf32, #tpu.memory_space<vmem>>, vector<8x128xf32>
      %c0_22 = arith.constant 0 : index
      %c0_23 = arith.constant 0 : index
      %30 = vector.load %arg11[%c0_22, %c0_23] : memref<8x128xf32, #tpu.memory_space<vmem>>, vector<8x128xf32>
      tpu.vector_store %arg11[%c0_22, %c0_23], %29 {strides = array<i32>} : memref<8x128xf32, #tpu.memory_space<vmem>>, vector<8x128xf32>,
      %c0_24 = arith.constant 0 : index
      %c0_25 = arith.constant 0 : index
      %31 = vector.load %arg4[%c0_24, %c0_25] : memref<8x128xf32, #tpu.memory_space<vmem>>, vector<8x128xf32>
      %c0_26 = arith.constant 0 : index
      %c0_27 = arith.constant 0 : index
      %32 = vector.load %arg12[%c0_26, %c0_27] : memref<8x128xf32, #tpu.memory_space<vmem>>, vector<8x128xf32>
      tpu.vector_store %arg12[%c0_26, %c0_27], %31 {strides = array<i32>} : memref<8x128xf32, #tpu.memory_space<vmem>>, vector<8x128xf32>,
    } else {
    }
    %c0 = arith.constant 0 : index
    %c0_1 = arith.constant 0 : index
    %3 = vector.load %arg5[%c0, %c0_1] : memref<128x512xf32, #tpu.memory_space<vmem>>, vector<128x512xf32>
    %c0_2 = arith.constant 0 : index
    %c0_3 = arith.constant 0 : index
    %4 = vector.load %arg6[%c0_2, %c0_3] : memref<128x128xf32, #tpu.memory_space<vmem>>, vector<128x128xf32>
    %c0_4 = arith.constant 0 : index
    %c0_5 = arith.constant 0 : index
    %5 = vector.load %arg7[%c0_4, %c0_5] : memref<1x128xf32, #tpu.memory_space<vmem>>, vector<1x128xf32>
    %c0_i32_6 = arith.constant 0 : i32
    %c4_i32 = arith.constant 4 : i32
    %6 = arith.muli %arg1, %c4_i32 : i32
    %7 = arith.addi %6, %c0_i32_6 : i32
    %c8_i32 = arith.constant 8 : i32
    %8 = arith.cmpi slt, %7, %c8_i32 : i32
    %9 = arith.extui %8 : i1 to i32
    %c0_i32_7 = arith.constant 0 : i32
    %10 = arith.cmpi ne, %9, %c0_i32_7 : i32
    scf.if %10 {
      %c0_20 = arith.constant 0 : index
      %c0_21 = arith.constant 0 : index
      %29 = vector.load %arg11[%c0_20, %c0_21] : memref<8x128xf32, #tpu.memory_space<vmem>>, vector<8x128xf32>
      %c0_22 = arith.constant 0 : index
      %c0_23 = arith.constant 0 : index
      %30 = vector.load %arg12[%c0_22, %c0_23] : memref<8x128xf32, #tpu.memory_space<vmem>>, vector<8x128xf32>
      %31 = arith.index_cast %c0_i32_6 : i32 to index
      %c0_24 = arith.constant 0 : index
      %c0_25 = arith.constant 0 : index
      %32 = vector.load %arg2[%31, %c0_24, %c0_25] : memref<4x8x640xbf16, #tpu.memory_space<vmem>>, vector<1x8x640xbf16>
      %33 = vector.shape_cast %32 : vector<1x8x640xbf16> to vector<8x640xbf16>
      %34 = arith.extf %33 : vector<8x640xbf16> to vector<8x640xf32>
      %35 = vector.extract_strided_slice %34 {offsets = [0, 512], sizes = [8, 1], strides = [1, 1]} : vector<8x640xf32> to vector<8x1xf32>
      %cst = arith.constant dense<0.000000e+00> : vector<8x128xf32>
      %36 = tpu.matmul %30, %4, %cst {dimension_numbers = #tpu.dot_dimension_numbers<[1], [0], [0], [1], [0, 0, 1, 1], [], []>} : vector<8x128xf32>, vector<128x128xf32>, vector<8x128xf32> -> vector<8x128xf32>
      %cst_26 = arith.constant dense<0.000000e+00> : vector<8x512xf32>
      %37 = tpu.matmul %29, %3, %cst_26 {dimension_numbers = #tpu.dot_dimension_numbers<[1], [0], [0], [1], [0, 0, 1, 1], [], []>} : vector<8x128xf32>, vector<128x512xf32>, vector<8x512xf32> -> vector<8x512xf32>
      %38 = vector.broadcast %5 : vector<1x128xf32> to vector<8x128xf32>
      %39 = arith.addf %36, %38 : vector<8x128xf32>
      %40 = math.tanh %39 : vector<8x128xf32>
      %cst_27 = arith.constant 1.000000e+00 : f32
      %41 = vector.broadcast %cst_27 : f32 to vector<8x1xf32>
      %42 = arith.subf %35, %41 : vector<8x1xf32>
      %43 = vector.broadcast %42 : vector<8x1xf32> to vector<8x128xf32>
      %44 = arith.mulf %40, %43 : vector<8x128xf32>
      %45 = arith.addf %30, %44 : vector<8x128xf32>
      %46 = vector.extract_strided_slice %34 {offsets = [0, 0], sizes = [8, 512], strides = [1, 1]} : vector<8x640xf32> to vector<8x512xf32>
      %47 = arith.addf %37, %46 : vector<8x512xf32>
      %48 = vector.extract_strided_slice %47 {offsets = [0, 0], sizes = [8, 128], strides = [1, 1]} : vector<8x512xf32> to vector<8x128xf32>
      %49 = arith.negf %48 : vector<8x128xf32>
      %50 = math.exp %49 : vector<8x128xf32>
      %cst_28 = arith.constant 1.000000e+00 : f32
      %51 = vector.broadcast %cst_28 : f32 to vector<8x128xf32>
      %52 = arith.addf %51, %50 : vector<8x128xf32>
      %53 = arith.divf %51, %52 : vector<8x128xf32>
      %54 = vector.extract_strided_slice %47 {offsets = [0, 128], sizes = [8, 128], strides = [1, 1]} : vector<8x512xf32> to vector<8x128xf32>
      %55 = arith.negf %54 : vector<8x128xf32>
      %56 = math.exp %55 : vector<8x128xf32>
      %cst_29 = arith.constant 1.000000e+00 : f32
      %57 = vector.broadcast %cst_29 : f32 to vector<8x128xf32>
      %58 = arith.addf %57, %56 : vector<8x128xf32>
      %59 = arith.divf %57, %58 : vector<8x128xf32>
      %60 = vector.extract_strided_slice %47 {offsets = [0, 256], sizes = [8, 128], strides = [1, 1]} : vector<8x512xf32> to vector<8x128xf32>
      %61 = arith.negf %60 : vector<8x128xf32>
      %62 = math.exp %61 : vector<8x128xf32>
      %cst_30 = arith.constant 1.000000e+00 : f32
      %63 = vector.broadcast %cst_30 : f32 to vector<8x128xf32>
      %64 = arith.addf %63, %62 : vector<8x128xf32>
      %65 = arith.divf %63, %64 : vector<8x128xf32>
      %66 = vector.extract_strided_slice %47 {offsets = [0, 384], sizes = [8, 128], strides = [1, 1]} : vector<8x512xf32> to vector<8x128xf32>
      %67 = arith.negf %66 : vector<8x128xf32>
      %68 = math.exp %67 : vector<8x128xf32>
      %cst_31 = arith.constant 1.000000e+00 : f32
      %69 = vector.broadcast %cst_31 : f32 to vector<8x128xf32>
      %70 = arith.addf %69, %68 : vector<8x128xf32>
      %71 = arith.divf %69, %70 : vector<8x128xf32>
      %72 = arith.mulf %53, %45 : vector<8x128xf32>
      %73 = arith.mulf %59, %71 : vector<8x128xf32>
      %74 = arith.addf %72, %73 : vector<8x128xf32>
      %75 = math.tanh %74 : vector<8x128xf32>
      %76 = arith.mulf %65, %75 : vector<8x128xf32>
      %c0_32 = arith.constant 0 : index
      %c0_33 = arith.constant 0 : index
      %77 = vector.load %arg11[%c0_32, %c0_33] : memref<8x128xf32, #tpu.memory_space<vmem>>, vector<8x128xf32>
      tpu.vector_store %arg11[%c0_32, %c0_33], %76 {strides = array<i32>} : memref<8x128xf32, #tpu.memory_space<vmem>>, vector<8x128xf32>,
      %c0_34 = arith.constant 0 : index
      %c0_35 = arith.constant 0 : index
      %78 = vector.load %arg12[%c0_34, %c0_35] : memref<8x128xf32, #tpu.memory_space<vmem>>, vector<8x128xf32>
      tpu.vector_store %arg12[%c0_34, %c0_35], %74 {strides = array<i32>} : memref<8x128xf32, #tpu.memory_space<vmem>>, vector<8x128xf32>,
      %79 = arith.truncf %65 : vector<8x128xf32> to vector<8x128xbf16>
      %80 = arith.index_cast %c0_i32_6 : i32 to index
      %c0_36 = arith.constant 0 : index
      %c0_37 = arith.constant 0 : index
      %81 = vector.load %arg8[%80, %c0_36, %c0_37] : memref<4x8x128xbf16, #tpu.memory_space<vmem>>, vector<1x8x128xbf16>
      %82 = vector.shape_cast %81 : vector<1x8x128xbf16> to vector<8x128xbf16>
      %83 = vector.shape_cast %79 : vector<8x128xbf16> to vector<1x8x128xbf16>
      tpu.vector_store %arg8[%80, %c0_36, %c0_37], %83 {strides = array<i32>} : memref<4x8x128xbf16, #tpu.memory_space<vmem>>, vector<1x8x128xbf16>,
    } else {
    }
    %c1_i32 = arith.constant 1 : i32
    %c4_i32_8 = arith.constant 4 : i32
    %11 = arith.muli %arg1, %c4_i32_8 : i32
    %12 = arith.addi %11, %c1_i32 : i32
    %c8_i32_9 = arith.constant 8 : i32
    %13 = arith.cmpi slt, %12, %c8_i32_9 : i32
    %14 = arith.extui %13 : i1 to i32
    %c0_i32_10 = arith.constant 0 : i32
    %15 = arith.cmpi ne, %14, %c0_i32_10 : i32
    scf.if %15 {
      %c0_20 = arith.constant 0 : index
      %c0_21 = arith.constant 0 : index
      %29 = vector.load %arg11[%c0_20, %c0_21] : memref<8x128xf32, #tpu.memory_space<vmem>>, vector<8x128xf32>
      %c0_22 = arith.constant 0 : index
      %c0_23 = arith.constant 0 : index
      %30 = vector.load %arg12[%c0_22, %c0_23] : memref<8x128xf32, #tpu.memory_space<vmem>>, vector<8x128xf32>
      %31 = arith.index_cast %c1_i32 : i32 to index
      %c0_24 = arith.constant 0 : index
      %c0_25 = arith.constant 0 : index
      %32 = vector.load %arg2[%31, %c0_24, %c0_25] : memref<4x8x640xbf16, #tpu.memory_space<vmem>>, vector<1x8x640xbf16>
      %33 = vector.shape_cast %32 : vector<1x8x640xbf16> to vector<8x640xbf16>
      %34 = arith.extf %33 : vector<8x640xbf16> to vector<8x640xf32>
      %35 = vector.extract_strided_slice %34 {offsets = [0, 512], sizes = [8, 1], strides = [1, 1]} : vector<8x640xf32> to vector<8x1xf32>
      %cst = arith.constant dense<0.000000e+00> : vector<8x128xf32>
      %36 = tpu.matmul %30, %4, %cst {dimension_numbers = #tpu.dot_dimension_numbers<[1], [0], [0], [1], [0, 0, 1, 1], [], []>} : vector<8x128xf32>, vector<128x128xf32>, vector<8x128xf32> -> vector<8x128xf32>
      %cst_26 = arith.constant dense<0.000000e+00> : vector<8x512xf32>
      %37 = tpu.matmul %29, %3, %cst_26 {dimension_numbers = #tpu.dot_dimension_numbers<[1], [0], [0], [1], [0, 0, 1, 1], [], []>} : vector<8x128xf32>, vector<128x512xf32>, vector<8x512xf32> -> vector<8x512xf32>
      %38 = vector.broadcast %5 : vector<1x128xf32> to vector<8x128xf32>
      %39 = arith.addf %36, %38 : vector<8x128xf32>
      %40 = math.tanh %39 : vector<8x128xf32>
      %cst_27 = arith.constant 1.000000e+00 : f32
      %41 = vector.broadcast %cst_27 : f32 to vector<8x1xf32>
      %42 = arith.subf %35, %41 : vector<8x1xf32>
      %43 = vector.broadcast %42 : vector<8x1xf32> to vector<8x128xf32>
      %44 = arith.mulf %40, %43 : vector<8x128xf32>
      %45 = arith.addf %30, %44 : vector<8x128xf32>
      %46 = vector.extract_strided_slice %34 {offsets = [0, 0], sizes = [8, 512], strides = [1, 1]} : vector<8x640xf32> to vector<8x512xf32>
      %47 = arith.addf %37, %46 : vector<8x512xf32>
      %48 = vector.extract_strided_slice %47 {offsets = [0, 0], sizes = [8, 128], strides = [1, 1]} : vector<8x512xf32> to vector<8x128xf32>
      %49 = arith.negf %48 : vector<8x128xf32>
      %50 = math.exp %49 : vector<8x128xf32>
      %cst_28 = arith.constant 1.000000e+00 : f32
      %51 = vector.broadcast %cst_28 : f32 to vector<8x128xf32>
      %52 = arith.addf %51, %50 : vector<8x128xf32>
      %53 = arith.divf %51, %52 : vector<8x128xf32>
      %54 = vector.extract_strided_slice %47 {offsets = [0, 128], sizes = [8, 128], strides = [1, 1]} : vector<8x512xf32> to vector<8x128xf32>
      %55 = arith.negf %54 : vector<8x128xf32>
      %56 = math.exp %55 : vector<8x128xf32>
      %cst_29 = arith.constant 1.000000e+00 : f32
      %57 = vector.broadcast %cst_29 : f32 to vector<8x128xf32>
      %58 = arith.addf %57, %56 : vector<8x128xf32>
      %59 = arith.divf %57, %58 : vector<8x128xf32>
      %60 = vector.extract_strided_slice %47 {offsets = [0, 256], sizes = [8, 128], strides = [1, 1]} : vector<8x512xf32> to vector<8x128xf32>
      %61 = arith.negf %60 : vector<8x128xf32>
      %62 = math.exp %61 : vector<8x128xf32>
      %cst_30 = arith.constant 1.000000e+00 : f32
      %63 = vector.broadcast %cst_30 : f32 to vector<8x128xf32>
      %64 = arith.addf %63, %62 : vector<8x128xf32>
      %65 = arith.divf %63, %64 : vector<8x128xf32>
      %66 = vector.extract_strided_slice %47 {offsets = [0, 384], sizes = [8, 128], strides = [1, 1]} : vector<8x512xf32> to vector<8x128xf32>
      %67 = arith.negf %66 : vector<8x128xf32>
      %68 = math.exp %67 : vector<8x128xf32>
      %cst_31 = arith.constant 1.000000e+00 : f32
      %69 = vector.broadcast %cst_31 : f32 to vector<8x128xf32>
      %70 = arith.addf %69, %68 : vector<8x128xf32>
      %71 = arith.divf %69, %70 : vector<8x128xf32>
      %72 = arith.mulf %53, %45 : vector<8x128xf32>
      %73 = arith.mulf %59, %71 : vector<8x128xf32>
      %74 = arith.addf %72, %73 : vector<8x128xf32>
      %75 = math.tanh %74 : vector<8x128xf32>
      %76 = arith.mulf %65, %75 : vector<8x128xf32>
      %c0_32 = arith.constant 0 : index
      %c0_33 = arith.constant 0 : index
      %77 = vector.load %arg11[%c0_32, %c0_33] : memref<8x128xf32, #tpu.memory_space<vmem>>, vector<8x128xf32>
      tpu.vector_store %arg11[%c0_32, %c0_33], %76 {strides = array<i32>} : memref<8x128xf32, #tpu.memory_space<vmem>>, vector<8x128xf32>,
      %c0_34 = arith.constant 0 : index
      %c0_35 = arith.constant 0 : index
      %78 = vector.load %arg12[%c0_34, %c0_35] : memref<8x128xf32, #tpu.memory_space<vmem>>, vector<8x128xf32>
      tpu.vector_store %arg12[%c0_34, %c0_35], %74 {strides = array<i32>} : memref<8x128xf32, #tpu.memory_space<vmem>>, vector<8x128xf32>,
      %79 = arith.truncf %65 : vector<8x128xf32> to vector<8x128xbf16>
      %80 = arith.index_cast %c1_i32 : i32 to index
      %c0_36 = arith.constant 0 : index
      %c0_37 = arith.constant 0 : index
      %81 = vector.load %arg8[%80, %c0_36, %c0_37] : memref<4x8x128xbf16, #tpu.memory_space<vmem>>, vector<1x8x128xbf16>
      %82 = vector.shape_cast %81 : vector<1x8x128xbf16> to vector<8x128xbf16>
      %83 = vector.shape_cast %79 : vector<8x128xbf16> to vector<1x8x128xbf16>
      tpu.vector_store %arg8[%80, %c0_36, %c0_37], %83 {strides = array<i32>} : memref<4x8x128xbf16, #tpu.memory_space<vmem>>, vector<1x8x128xbf16>,
    } else {
    }
    %c2_i32 = arith.constant 2 : i32
    %c4_i32_11 = arith.constant 4 : i32
    %16 = arith.muli %arg1, %c4_i32_11 : i32
    %17 = arith.addi %16, %c2_i32 : i32
    %c8_i32_12 = arith.constant 8 : i32
    %18 = arith.cmpi slt, %17, %c8_i32_12 : i32
    %19 = arith.extui %18 : i1 to i32
    %c0_i32_13 = arith.constant 0 : i32
    %20 = arith.cmpi ne, %19, %c0_i32_13 : i32
    scf.if %20 {
      %c0_20 = arith.constant 0 : index
      %c0_21 = arith.constant 0 : index
      %29 = vector.load %arg11[%c0_20, %c0_21] : memref<8x128xf32, #tpu.memory_space<vmem>>, vector<8x128xf32>
      %c0_22 = arith.constant 0 : index
      %c0_23 = arith.constant 0 : index
      %30 = vector.load %arg12[%c0_22, %c0_23] : memref<8x128xf32, #tpu.memory_space<vmem>>, vector<8x128xf32>
      %31 = arith.index_cast %c2_i32 : i32 to index
      %c0_24 = arith.constant 0 : index
      %c0_25 = arith.constant 0 : index
      %32 = vector.load %arg2[%31, %c0_24, %c0_25] : memref<4x8x640xbf16, #tpu.memory_space<vmem>>, vector<1x8x640xbf16>
      %33 = vector.shape_cast %32 : vector<1x8x640xbf16> to vector<8x640xbf16>
      %34 = arith.extf %33 : vector<8x640xbf16> to vector<8x640xf32>
      %35 = vector.extract_strided_slice %34 {offsets = [0, 512], sizes = [8, 1], strides = [1, 1]} : vector<8x640xf32> to vector<8x1xf32>
      %cst = arith.constant dense<0.000000e+00> : vector<8x128xf32>
      %36 = tpu.matmul %30, %4, %cst {dimension_numbers = #tpu.dot_dimension_numbers<[1], [0], [0], [1], [0, 0, 1, 1], [], []>} : vector<8x128xf32>, vector<128x128xf32>, vector<8x128xf32> -> vector<8x128xf32>
      %cst_26 = arith.constant dense<0.000000e+00> : vector<8x512xf32>
      %37 = tpu.matmul %29, %3, %cst_26 {dimension_numbers = #tpu.dot_dimension_numbers<[1], [0], [0], [1], [0, 0, 1, 1], [], []>} : vector<8x128xf32>, vector<128x512xf32>, vector<8x512xf32> -> vector<8x512xf32>
      %38 = vector.broadcast %5 : vector<1x128xf32> to vector<8x128xf32>
      %39 = arith.addf %36, %38 : vector<8x128xf32>
      %40 = math.tanh %39 : vector<8x128xf32>
      %cst_27 = arith.constant 1.000000e+00 : f32
      %41 = vector.broadcast %cst_27 : f32 to vector<8x1xf32>
      %42 = arith.subf %35, %41 : vector<8x1xf32>
      %43 = vector.broadcast %42 : vector<8x1xf32> to vector<8x128xf32>
      %44 = arith.mulf %40, %43 : vector<8x128xf32>
      %45 = arith.addf %30, %44 : vector<8x128xf32>
      %46 = vector.extract_strided_slice %34 {offsets = [0, 0], sizes = [8, 512], strides = [1, 1]} : vector<8x640xf32> to vector<8x512xf32>
      %47 = arith.addf %37, %46 : vector<8x512xf32>
      %48 = vector.extract_strided_slice %47 {offsets = [0, 0], sizes = [8, 128], strides = [1, 1]} : vector<8x512xf32> to vector<8x128xf32>
      %49 = arith.negf %48 : vector<8x128xf32>
      %50 = math.exp %49 : vector<8x128xf32>
      %cst_28 = arith.constant 1.000000e+00 : f32
      %51 = vector.broadcast %cst_28 : f32 to vector<8x128xf32>
      %52 = arith.addf %51, %50 : vector<8x128xf32>
      %53 = arith.divf %51, %52 : vector<8x128xf32>
      %54 = vector.extract_strided_slice %47 {offsets = [0, 128], sizes = [8, 128], strides = [1, 1]} : vector<8x512xf32> to vector<8x128xf32>
      %55 = arith.negf %54 : vector<8x128xf32>
      %56 = math.exp %55 : vector<8x128xf32>
      %cst_29 = arith.constant 1.000000e+00 : f32
      %57 = vector.broadcast %cst_29 : f32 to vector<8x128xf32>
      %58 = arith.addf %57, %56 : vector<8x128xf32>
      %59 = arith.divf %57, %58 : vector<8x128xf32>
      %60 = vector.extract_strided_slice %47 {offsets = [0, 256], sizes = [8, 128], strides = [1, 1]} : vector<8x512xf32> to vector<8x128xf32>
      %61 = arith.negf %60 : vector<8x128xf32>
      %62 = math.exp %61 : vector<8x128xf32>
      %cst_30 = arith.constant 1.000000e+00 : f32
      %63 = vector.broadcast %cst_30 : f32 to vector<8x128xf32>
      %64 = arith.addf %63, %62 : vector<8x128xf32>
      %65 = arith.divf %63, %64 : vector<8x128xf32>
      %66 = vector.extract_strided_slice %47 {offsets = [0, 384], sizes = [8, 128], strides = [1, 1]} : vector<8x512xf32> to vector<8x128xf32>
      %67 = arith.negf %66 : vector<8x128xf32>
      %68 = math.exp %67 : vector<8x128xf32>
      %cst_31 = arith.constant 1.000000e+00 : f32
      %69 = vector.broadcast %cst_31 : f32 to vector<8x128xf32>
      %70 = arith.addf %69, %68 : vector<8x128xf32>
      %71 = arith.divf %69, %70 : vector<8x128xf32>
      %72 = arith.mulf %53, %45 : vector<8x128xf32>
      %73 = arith.mulf %59, %71 : vector<8x128xf32>
      %74 = arith.addf %72, %73 : vector<8x128xf32>
      %75 = math.tanh %74 : vector<8x128xf32>
      %76 = arith.mulf %65, %75 : vector<8x128xf32>
      %c0_32 = arith.constant 0 : index
      %c0_33 = arith.constant 0 : index
      %77 = vector.load %arg11[%c0_32, %c0_33] : memref<8x128xf32, #tpu.memory_space<vmem>>, vector<8x128xf32>
      tpu.vector_store %arg11[%c0_32, %c0_33], %76 {strides = array<i32>} : memref<8x128xf32, #tpu.memory_space<vmem>>, vector<8x128xf32>,
      %c0_34 = arith.constant 0 : index
      %c0_35 = arith.constant 0 : index
      %78 = vector.load %arg12[%c0_34, %c0_35] : memref<8x128xf32, #tpu.memory_space<vmem>>, vector<8x128xf32>
      tpu.vector_store %arg12[%c0_34, %c0_35], %74 {strides = array<i32>} : memref<8x128xf32, #tpu.memory_space<vmem>>, vector<8x128xf32>,
      %79 = arith.truncf %65 : vector<8x128xf32> to vector<8x128xbf16>
      %80 = arith.index_cast %c2_i32 : i32 to index
      %c0_36 = arith.constant 0 : index
      %c0_37 = arith.constant 0 : index
      %81 = vector.load %arg8[%80, %c0_36, %c0_37] : memref<4x8x128xbf16, #tpu.memory_space<vmem>>, vector<1x8x128xbf16>
      %82 = vector.shape_cast %81 : vector<1x8x128xbf16> to vector<8x128xbf16>
      %83 = vector.shape_cast %79 : vector<8x128xbf16> to vector<1x8x128xbf16>
      tpu.vector_store %arg8[%80, %c0_36, %c0_37], %83 {strides = array<i32>} : memref<4x8x128xbf16, #tpu.memory_space<vmem>>, vector<1x8x128xbf16>,
    } else {
    }
    %c3_i32 = arith.constant 3 : i32
    %c4_i32_14 = arith.constant 4 : i32
    %21 = arith.muli %arg1, %c4_i32_14 : i32
    %22 = arith.addi %21, %c3_i32 : i32
    %c8_i32_15 = arith.constant 8 : i32
    %23 = arith.cmpi slt, %22, %c8_i32_15 : i32
    %24 = arith.extui %23 : i1 to i32
    %c0_i32_16 = arith.constant 0 : i32
    %25 = arith.cmpi ne, %24, %c0_i32_16 : i32
    scf.if %25 {
      %c0_20 = arith.constant 0 : index
      %c0_21 = arith.constant 0 : index
      %29 = vector.load %arg11[%c0_20, %c0_21] : memref<8x128xf32, #tpu.memory_space<vmem>>, vector<8x128xf32>
      %c0_22 = arith.constant 0 : index
      %c0_23 = arith.constant 0 : index
      %30 = vector.load %arg12[%c0_22, %c0_23] : memref<8x128xf32, #tpu.memory_space<vmem>>, vector<8x128xf32>
      %31 = arith.index_cast %c3_i32 : i32 to index
      %c0_24 = arith.constant 0 : index
      %c0_25 = arith.constant 0 : index
      %32 = vector.load %arg2[%31, %c0_24, %c0_25] : memref<4x8x640xbf16, #tpu.memory_space<vmem>>, vector<1x8x640xbf16>
      %33 = vector.shape_cast %32 : vector<1x8x640xbf16> to vector<8x640xbf16>
      %34 = arith.extf %33 : vector<8x640xbf16> to vector<8x640xf32>
      %35 = vector.extract_strided_slice %34 {offsets = [0, 512], sizes = [8, 1], strides = [1, 1]} : vector<8x640xf32> to vector<8x1xf32>
      %cst = arith.constant dense<0.000000e+00> : vector<8x128xf32>
      %36 = tpu.matmul %30, %4, %cst {dimension_numbers = #tpu.dot_dimension_numbers<[1], [0], [0], [1], [0, 0, 1, 1], [], []>} : vector<8x128xf32>, vector<128x128xf32>, vector<8x128xf32> -> vector<8x128xf32>
      %cst_26 = arith.constant dense<0.000000e+00> : vector<8x512xf32>
      %37 = tpu.matmul %29, %3, %cst_26 {dimension_numbers = #tpu.dot_dimension_numbers<[1], [0], [0], [1], [0, 0, 1, 1], [], []>} : vector<8x128xf32>, vector<128x512xf32>, vector<8x512xf32> -> vector<8x512xf32>
      %38 = vector.broadcast %5 : vector<1x128xf32> to vector<8x128xf32>
      %39 = arith.addf %36, %38 : vector<8x128xf32>
      %40 = math.tanh %39 : vector<8x128xf32>
      %cst_27 = arith.constant 1.000000e+00 : f32
      %41 = vector.broadcast %cst_27 : f32 to vector<8x1xf32>
      %42 = arith.subf %35, %41 : vector<8x1xf32>
      %43 = vector.broadcast %42 : vector<8x1xf32> to vector<8x128xf32>
      %44 = arith.mulf %40, %43 : vector<8x128xf32>
      %45 = arith.addf %30, %44 : vector<8x128xf32>
      %46 = vector.extract_strided_slice %34 {offsets = [0, 0], sizes = [8, 512], strides = [1, 1]} : vector<8x640xf32> to vector<8x512xf32>
      %47 = arith.addf %37, %46 : vector<8x512xf32>
      %48 = vector.extract_strided_slice %47 {offsets = [0, 0], sizes = [8, 128], strides = [1, 1]} : vector<8x512xf32> to vector<8x128xf32>
      %49 = arith.negf %48 : vector<8x128xf32>
      %50 = math.exp %49 : vector<8x128xf32>
      %cst_28 = arith.constant 1.000000e+00 : f32
      %51 = vector.broadcast %cst_28 : f32 to vector<8x128xf32>
      %52 = arith.addf %51, %50 : vector<8x128xf32>
      %53 = arith.divf %51, %52 : vector<8x128xf32>
      %54 = vector.extract_strided_slice %47 {offsets = [0, 128], sizes = [8, 128], strides = [1, 1]} : vector<8x512xf32> to vector<8x128xf32>
      %55 = arith.negf %54 : vector<8x128xf32>
      %56 = math.exp %55 : vector<8x128xf32>
      %cst_29 = arith.constant 1.000000e+00 : f32
      %57 = vector.broadcast %cst_29 : f32 to vector<8x128xf32>
      %58 = arith.addf %57, %56 : vector<8x128xf32>
      %59 = arith.divf %57, %58 : vector<8x128xf32>
      %60 = vector.extract_strided_slice %47 {offsets = [0, 256], sizes = [8, 128], strides = [1, 1]} : vector<8x512xf32> to vector<8x128xf32>
      %61 = arith.negf %60 : vector<8x128xf32>
      %62 = math.exp %61 : vector<8x128xf32>
      %cst_30 = arith.constant 1.000000e+00 : f32
      %63 = vector.broadcast %cst_30 : f32 to vector<8x128xf32>
      %64 = arith.addf %63, %62 : vector<8x128xf32>
      %65 = arith.divf %63, %64 : vector<8x128xf32>
      %66 = vector.extract_strided_slice %47 {offsets = [0, 384], sizes = [8, 128], strides = [1, 1]} : vector<8x512xf32> to vector<8x128xf32>
      %67 = arith.negf %66 : vector<8x128xf32>
      %68 = math.exp %67 : vector<8x128xf32>
      %cst_31 = arith.constant 1.000000e+00 : f32
      %69 = vector.broadcast %cst_31 : f32 to vector<8x128xf32>
      %70 = arith.addf %69, %68 : vector<8x128xf32>
      %71 = arith.divf %69, %70 : vector<8x128xf32>
      %72 = arith.mulf %53, %45 : vector<8x128xf32>
      %73 = arith.mulf %59, %71 : vector<8x128xf32>
      %74 = arith.addf %72, %73 : vector<8x128xf32>
      %75 = math.tanh %74 : vector<8x128xf32>
      %76 = arith.mulf %65, %75 : vector<8x128xf32>
      %c0_32 = arith.constant 0 : index
      %c0_33 = arith.constant 0 : index
      %77 = vector.load %arg11[%c0_32, %c0_33] : memref<8x128xf32, #tpu.memory_space<vmem>>, vector<8x128xf32>
      tpu.vector_store %arg11[%c0_32, %c0_33], %76 {strides = array<i32>} : memref<8x128xf32, #tpu.memory_space<vmem>>, vector<8x128xf32>,
      %c0_34 = arith.constant 0 : index
      %c0_35 = arith.constant 0 : index
      %78 = vector.load %arg12[%c0_34, %c0_35] : memref<8x128xf32, #tpu.memory_space<vmem>>, vector<8x128xf32>
      tpu.vector_store %arg12[%c0_34, %c0_35], %74 {strides = array<i32>} : memref<8x128xf32, #tpu.memory_space<vmem>>, vector<8x128xf32>,
      %79 = arith.truncf %65 : vector<8x128xf32> to vector<8x128xbf16>
      %80 = arith.index_cast %c3_i32 : i32 to index
      %c0_36 = arith.constant 0 : index
      %c0_37 = arith.constant 0 : index
      %81 = vector.load %arg8[%80, %c0_36, %c0_37] : memref<4x8x128xbf16, #tpu.memory_space<vmem>>, vector<1x8x128xbf16>
      %82 = vector.shape_cast %81 : vector<1x8x128xbf16> to vector<8x128xbf16>
      %83 = vector.shape_cast %79 : vector<8x128xbf16> to vector<1x8x128xbf16>
      tpu.vector_store %arg8[%80, %c0_36, %c0_37], %83 {strides = array<i32>} : memref<4x8x128xbf16, #tpu.memory_space<vmem>>, vector<1x8x128xbf16>,
    } else {
    }
    %c4_i32_17 = arith.constant 4 : i32
    %c1_i32_18 = arith.constant 1 : i32
    %26 = arith.cmpi eq, %arg1, %c1_i32_18 : i32
    %27 = arith.extui %26 : i1 to i32
    %c0_i32_19 = arith.constant 0 : i32
    %28 = arith.cmpi ne, %27, %c0_i32_19 : i32
    scf.if %28 {
      %c0_20 = arith.constant 0 : index
      %c0_21 = arith.constant 0 : index
      %29 = vector.load %arg11[%c0_20, %c0_21] : memref<8x128xf32, #tpu.memory_space<vmem>>, vector<8x128xf32>
      %c0_22 = arith.constant 0 : index
      %c0_23 = arith.constant 0 : index
      %30 = vector.load %arg9[%c0_22, %c0_23] : memref<8x128xf32, #tpu.memory_space<vmem>>, vector<8x128xf32>
      tpu.vector_store %arg9[%c0_22, %c0_23], %29 {strides = array<i32>} : memref<8x128xf32, #tpu.memory_space<vmem>>, vector<8x128xf32>,
      %c0_24 = arith.constant 0 : index
      %c0_25 = arith.constant 0 : index
      %31 = vector.load %arg12[%c0_24, %c0_25] : memref<8x128xf32, #tpu.memory_space<vmem>>, vector<8x128xf32>
      %c0_26 = arith.constant 0 : index
      %c0_27 = arith.constant 0 : index
      %32 = vector.load %arg10[%c0_26, %c0_27] : memref<8x128xf32, #tpu.memory_space<vmem>>, vector<8x128xf32>
      tpu.vector_store %arg10[%c0_26, %c0_27], %31 {strides = array<i32>} : memref<8x128xf32, #tpu.memory_space<vmem>>, vector<8x128xf32>,
    } else {
    }
    return
  }
  func.func @transform_0(%arg0: i32, %arg1: i32) -> (i32, i32, i32) {
    %c0_i32 = arith.constant 0 : i32
    %c0_i32_0 = arith.constant 0 : i32
    return %arg1, %arg0, %c0_i32 : i32, i32, i32
  }
  func.func @transform_1(%arg0: i32, %arg1: i32) -> (i32, i32) {
    %c0_i32 = arith.constant 0 : i32
    %c0_i32_0 = arith.constant 0 : i32
    return %arg0, %c0_i32 : i32, i32
  }
  func.func @transform_2(%arg0: i32, %arg1: i32) -> (i32, i32) {
    %c0_i32 = arith.constant 0 : i32
    %c0_i32_0 = arith.constant 0 : i32
    return %arg0, %c0_i32 : i32, i32
  }
  func.func @transform_3(%arg0: i32, %arg1: i32) -> (i32, i32) {
    %c0_i32 = arith.constant 0 : i32
    %c0_i32_0 = arith.constant 0 : i32
    %c0_i32_1 = arith.constant 0 : i32
    return %c0_i32, %c0_i32_0 : i32, i32
  }
  func.func @transform_4(%arg0: i32, %arg1: i32) -> (i32, i32) {
    %c0_i32 = arith.constant 0 : i32
    %c0_i32_0 = arith.constant 0 : i32
    %c0_i32_1 = arith.constant 0 : i32
    return %c0_i32, %c0_i32_0 : i32, i32
  }
  func.func @transform_5(%arg0: i32, %arg1: i32) -> (i32, i32) {
    %c0_i32 = arith.constant 0 : i32
    %c0_i32_0 = arith.constant 0 : i32
    %c0_i32_1 = arith.constant 0 : i32
    return %c0_i32, %c0_i32_0 : i32, i32
  }
  func.func @transform_6(%arg0: i32, %arg1: i32) -> (i32, i32, i32) {
    %c0_i32 = arith.constant 0 : i32
    %c0_i32_0 = arith.constant 0 : i32
    return %arg1, %arg0, %c0_i32 : i32, i32, i32
  }
  func.func @transform_7(%arg0: i32, %arg1: i32) -> (i32, i32) {
    %c0_i32 = arith.constant 0 : i32
    %c0_i32_0 = arith.constant 0 : i32
    return %arg0, %c0_i32 : i32, i32
  }
  func.func @transform_8(%arg0: i32, %arg1: i32) -> (i32, i32) {
    %c0_i32 = arith.constant 0 : i32
    %c0_i32_0 = arith.constant 0 : i32
    return %arg0, %c0_i32 : i32, i32
  }
}

</mosaic_0001>

<llo_original>
// kernel: tpu_custom_call.1
$region0: #{tpu_custom_call.1}
  #allocation0 [shape = 'u32[]', space=smem, size = 0x4, offset = 0x4, fixed_abs, tag = 'smem constant byte address 0x4 - core index']
  #allocation1 [shape = 'u32[144,128]{1,0:T(1,128)}', space=vmem, size = 0x12000, scoped, tag = 'internal scratch']
  #allocation2 [shape = 'f32[8,128]{1,0:T(8,128)}', space=vmem, size = 0x1000, scoped, tag = 'scratch operand']
  #allocation3 [shape = 'f32[8,128]{1,0:T(8,128)}', space=vmem, size = 0x1000, scoped, tag = 'scratch operand']
  %s0 = inlined_call_operand.hbm [shape: bf16[8,8,640], index: 0, kind: input, shape index: {}]
  %s1 = inlined_call_operand.hbm [shape: f32[8,128], index: 1, kind: input, shape index: {}, may-alias: {1,7}]
  %s2 = inlined_call_operand.hbm [shape: f32[8,128], index: 2, kind: input, shape index: {}, may-alias: {2,8}]
  %s3 = inlined_call_operand.hbm [shape: f32[128,512], index: 3, kind: input, shape index: {}]
  %s4 = inlined_call_operand.hbm [shape: f32[128,128], index: 4, kind: input, shape index: {}]
  %s5 = inlined_call_operand.vmem [shape: f32[1,128], index: 5, kind: input, shape index: {}]
  %s6 = inlined_call_operand.hbm [shape: bf16[8,8,128], index: 6, kind: output, shape index: {0}]
  %s7 = inlined_call_operand.hbm [shape: f32[8,128], index: 7, kind: output, shape index: {1}, may-alias: {1,7}]
  %s8 = inlined_call_operand.hbm [shape: f32[8,128], index: 8, kind: output, shape index: {2}, may-alias: {2,8}]
  %9 = xla_tuple %s6, %s7, %s8
  %s10 = sld [smem:[#allocation0]]
  $region117: #{tpu_custom_call.1} parent=0
    _
  %s12 = ssub.s32 1, %s10
  %s13 = scalar_select 0, %s12, %s10
  $region1: #{tpu_custom_call.1} parent=0
    #allocation4 [shape = 'u8[81920]{0}', space=vmem, size = 0x14000, scoped, tag = 'input window, operand 0']
    #allocation5 [shape = 's32[2]{0}', space=sflag, size = 0x8, scoped, tag = 'scoped memory for tpu_custom_call.1']
    #allocation6 [shape = 's32[2]{0}', space=sflag, size = 0x8, scoped, tag = 'scoped memory for tpu_custom_call.1']
    #allocation7 [shape = 'u8[4096]{0}', space=vmem, size = 0x1000, scoped, tag = 'input window, operand 1, single buffered']
    #allocation8 [shape = 's32[1]{0}', space=sflag, size = 0x4, scoped, tag = 'scoped memory for tpu_custom_call.1']
    #allocation9 [shape = 'u8[4096]{0}', space=vmem, size = 0x1000, scoped, tag = 'input window, operand 2, single buffered']
    #allocation10 [shape = 'u8[262144]{0}', space=vmem, size = 0x40000, scoped, tag = 'input window, operand 3, single buffered']
    #allocation11 [shape = 's32[1]{0}', space=sflag, size = 0x4, scoped, tag = 'scoped memory for tpu_custom_call.1']
    #allocation12 [shape = 'u8[65536]{0}', space=vmem, size = 0x10000, scoped, tag = 'input window, operand 4, single buffered']
    #allocation13 [shape = 'u8[16384]{0}', space=vmem, size = 0x4000, scoped, tag = 'output window, operand 0']
    #allocation14 [shape = 'u8[4096]{0}', space=vmem, size = 0x1000, scoped, tag = 'output window, operand 1, single buffered']
    #allocation15 [shape = 's32[1]{0}', space=sflag, size = 0x4, scoped, tag = 'scoped memory for tpu_custom_call.1']
    #allocation16 [shape = 'u8[4096]{0}', space=vmem, size = 0x1000, scoped, tag = 'output window, operand 2, single buffered']
    %14 = vsyncpa [#allocation5], 0
    %s15 = scalar_lea.sflag [#allocation5], 1
    %16 = vsyncpa %s15, 0
    %17 = vsyncpa [#allocation8], 0
    %18 = vsyncpa [#allocation11], 0
    %19 = vsyncpa [#allocation6], 0
    %s20 = scalar_lea.sflag [#allocation6], 1
    %21 = vsyncpa %s20, 0
    %22 = vsyncpa [#allocation15], 0
    loop: start=0, step=1, limit=4
    $region2: #{tpu_custom_call.1} parent=1 // loop_pre_header
      _
    $region3: #{tpu_custom_call.1} parent=1 // loop_header
      %s24 = sphi 0, %s28
      %p25 = scmp.ge.s32.totalorder %s24, 4
      %s31 = sphi 0, %s43
      %s32 = sphi 0, %s39
      %s33 = sphi 0, %s31
      %s34 = sphi 0, %s32
      %s35 = sphi 0, %s33
      %s36 = sphi 0, %s34
      %s48 = sphi 0, %s50
      %s51 = sphi 0, %s48
      %s52 = sphi 0, %s51
      %s68 = sphi 0, %s52
      %s74 = sphi 0, %s76
      %s77 = sphi 0, %s74
      %s78 = sphi 0, %s77
      %s94 = sphi 0, %s78
      %s100 = sphi 0, %s102
      %s103 = sphi 0, %s100
      %s104 = sphi 0, %s103
      %s120 = sphi 0, %s104
      %s124 = sphi 0, %s124
      %s126 = sphi 0, %s124
      %s127 = sphi 0, %s126
      %s141 = sphi 0, %s127
      %s145 = sphi 0, %s145
      %s147 = sphi 0, %s145
      %s148 = sphi 0, %s147
      %s162 = sphi 0, %s148
      %s166 = sphi 0, %s166
      %s168 = sphi 0, %s166
      %s169 = sphi 0, %s168
      %s183 = sphi 0, %s169
      %s191 = sphi 0, %s193
      %s194 = sphi 0, %s191
      %s195 = sphi 0, %s194
      %s211 = sphi 0, %s195
      %s217 = sphi 0, %s219
      %s220 = sphi 0, %s217
      %s221 = sphi 0, %s220
      %s237 = sphi 0, %s221
      %s243 = sphi 0, %s245
      %s246 = sphi 0, %s243
      %s247 = sphi 0, %s246
      %s263 = sphi 0, %s247
    $region4: #{tpu_custom_call.1} parent=1 // loop_header_branch
      %27 = sbr.rel (%p25) target = $region8
    $region5: #{tpu_custom_call.1} parent=1 // loop_body
      %s29 = ssub.s32 %s24, 1
      %s30 = ssub.s32 %s24, 2
      %s37 = sadd.s32 1, %s32
      %p38 = scmp.ge.s32.totalorder %s37, 2
      %s39 = scalar_select %p38, 0, %s37
      %s40 = sadd.s32 1, %s31
      %s41 = scalar_select %p38, %s40, %s31
      %p42 = scmp.ge.s32.totalorder %s41, 1
      %s43 = scalar_select %p42, 0, %s41
      %s44 = ssub.s32 %s32, %s39
      %s45 = ssub.s32 %s31, %s43
      %s46 = sor.u32 %s44, %s45
      %p47 = scmp.eq.s32.totalorder %s46, 0
      %s49 = sadd.s32 %s48, 1
      %s50 = scalar_select %p47, %s48, %s49
      %p53 = pneg %p47
      %p54 = scmp.eq.s32.totalorder %s24, 1
      %p55 = por %p53, %p54
      %p56 = scmp.ne.s32.totalorder %s48, %s51
      %p57 = scmp.eq.s32.totalorder %s24, 0
      %p58 = por %p56, %p57
      %p59 = scmp.ne.s32.totalorder %s48, %s51
      %p60 = scmp.eq.s32.totalorder %s29, 1
      %p61 = por %p59, %p60
      %p62 = scmp.ne.s32.totalorder %s51, %s52
      %p63 = scmp.eq.s32.totalorder %s29, 0
      %p64 = por %p62, %p63
      %p65 = scmp.ne.s32.totalorder %s51, %s52
      %p66 = scmp.eq.s32.totalorder %s30, 1
      %p67 = por %p65, %p66
      %p69 = scmp.ne.s32.totalorder %s52, %s68
      %p70 = scmp.eq.s32.totalorder %s30, 0
      %p71 = por %p69, %p70
      %s72 = ssub.s32 %s31, %s43
      %p73 = scmp.eq.s32.totalorder %s72, 0
      %s75 = sadd.s32 %s74, 1
      %s76 = scalar_select %p73, %s74, %s75
      %p79 = pneg %p73
      %p80 = scmp.eq.s32.totalorder %s24, 1
      %p81 = por %p79, %p80
      %p82 = scmp.ne.s32.totalorder %s74, %s77
      %p83 = scmp.eq.s32.totalorder %s24, 0
      %p84 = por %p82, %p83
      %p85 = scmp.ne.s32.totalorder %s74, %s77
      %p86 = scmp.eq.s32.totalorder %s29, 1
      %p87 = por %p85, %p86
      %p88 = scmp.ne.s32.totalorder %s77, %s78
      %p89 = scmp.eq.s32.totalorder %s29, 0
      %p90 = por %p88, %p89
      %p91 = scmp.ne.s32.totalorder %s77, %s78
      %p92 = scmp.eq.s32.totalorder %s30, 1
      %p93 = por %p91, %p92
      %p95 = scmp.ne.s32.totalorder %s78, %s94
      %p96 = scmp.eq.s32.totalorder %s30, 0
      %p97 = por %p95, %p96
      %s98 = ssub.s32 %s31, %s43
      %p99 = scmp.eq.s32.totalorder %s98, 0
      %s101 = sadd.s32 %s100, 1
      %s102 = scalar_select %p99, %s100, %s101
      %p105 = pneg %p99
      %p106 = scmp.eq.s32.totalorder %s24, 1
      %p107 = por %p105, %p106
      %p108 = scmp.ne.s32.totalorder %s100, %s103
      %p109 = scmp.eq.s32.totalorder %s24, 0
      %p110 = por %p108, %p109
      %p111 = scmp.ne.s32.totalorder %s100, %s103
      %p112 = scmp.eq.s32.totalorder %s29, 1
      %p113 = por %p111, %p112
      %p114 = scmp.ne.s32.totalorder %s103, %s104
      %p115 = scmp.eq.s32.totalorder %s29, 0
      %p116 = por %p114, %p115
      %p117 = scmp.ne.s32.totalorder %s103, %s104
      %p118 = scmp.eq.s32.totalorder %s30, 1
      %p119 = por %p117, %p118
      %p121 = scmp.ne.s32.totalorder %s104, %s120
      %p122 = scmp.eq.s32.totalorder %s30, 0
      %p123 = por %p121, %p122
      %s125 = sadd.s32 %s124, 1
      %p128 = scmp.eq.s32.totalorder %s24, 1
      %p129 = scmp.ne.s32.totalorder %s124, %s126
      %p130 = scmp.eq.s32.totalorder %s24, 0
      %p131 = por %p129, %p130
      %p132 = scmp.ne.s32.totalorder %s124, %s126
      %p133 = scmp.eq.s32.totalorder %s29, 1
      %p134 = por %p132, %p133
      %p135 = scmp.ne.s32.totalorder %s126, %s127
      %p136 = scmp.eq.s32.totalorder %s29, 0
      %p137 = por %p135, %p136
      %p138 = scmp.ne.s32.totalorder %s126, %s127
      %p139 = scmp.eq.s32.totalorder %s30, 1
      %p140 = por %p138, %p139
      %p142 = scmp.ne.s32.totalorder %s127, %s141
      %p143 = scmp.eq.s32.totalorder %s30, 0
      %p144 = por %p142, %p143
      %s146 = sadd.s32 %s145, 1
      %p149 = scmp.eq.s32.totalorder %s24, 1
      %p150 = scmp.ne.s32.totalorder %s145, %s147
      %p151 = scmp.eq.s32.totalorder %s24, 0
      %p152 = por %p150, %p151
      %p153 = scmp.ne.s32.totalorder %s145, %s147
      %p154 = scmp.eq.s32.totalorder %s29, 1
      %p155 = por %p153, %p154
      %p156 = scmp.ne.s32.totalorder %s147, %s148
      %p157 = scmp.eq.s32.totalorder %s29, 0
      %p158 = por %p156, %p157
      %p159 = scmp.ne.s32.totalorder %s147, %s148
      %p160 = scmp.eq.s32.totalorder %s30, 1
      %p161 = por %p159, %p160
      %p163 = scmp.ne.s32.totalorder %s148, %s162
      %p164 = scmp.eq.s32.totalorder %s30, 0
      %p165 = por %p163, %p164
      %s167 = sadd.s32 %s166, 1
      %p170 = scmp.eq.s32.totalorder %s24, 1
      %p171 = scmp.ne.s32.totalorder %s166, %s168
      %p172 = scmp.eq.s32.totalorder %s24, 0
      %p173 = por %p171, %p172
      %p174 = scmp.ne.s32.totalorder %s166, %s168
      %p175 = scmp.eq.s32.totalorder %s29, 1
      %p176 = por %p174, %p175
      %p177 = scmp.ne.s32.totalorder %s168, %s169
      %p178 = scmp.eq.s32.totalorder %s29, 0
      %p179 = por %p177, %p178
      %p180 = scmp.ne.s32.totalorder %s168, %s169
      %p181 = scmp.eq.s32.totalorder %s30, 1
      %p182 = por %p180, %p181
      %p184 = scmp.ne.s32.totalorder %s169, %s183
      %p185 = scmp.eq.s32.totalorder %s30, 0
      %p186 = por %p184, %p185
      %s187 = ssub.s32 %s32, %s39
      %s188 = ssub.s32 %s31, %s43
      %s189 = sor.u32 %s187, %s188
      %p190 = scmp.eq.s32.totalorder %s189, 0
      %s192 = sadd.s32 %s191, 1
      %s193 = scalar_select %p190, %s191, %s192
      %p196 = pneg %p190
      %p197 = scmp.eq.s32.totalorder %s24, 1
      %p198 = por %p196, %p197
      %p199 = scmp.ne.s32.totalorder %s191, %s194
      %p200 = scmp.eq.s32.totalorder %s24, 0
      %p201 = por %p199, %p200
      %p202 = scmp.ne.s32.totalorder %s191, %s194
      %p203 = scmp.eq.s32.totalorder %s29, 1
      %p204 = por %p202, %p203
      %p205 = scmp.ne.s32.totalorder %s194, %s195
      %p206 = scmp.eq.s32.totalorder %s29, 0
      %p207 = por %p205, %p206
      %p208 = scmp.ne.s32.totalorder %s194, %s195
      %p209 = scmp.eq.s32.totalorder %s30, 1
      %p210 = por %p208, %p209
      %p212 = scmp.ne.s32.totalorder %s195, %s211
      %p213 = scmp.eq.s32.totalorder %s30, 0
      %p214 = por %p212, %p213
      %s215 = ssub.s32 %s31, %s43
      %p216 = scmp.eq.s32.totalorder %s215, 0
      %s218 = sadd.s32 %s217, 1
      %s219 = scalar_select %p216, %s217, %s218
      %p222 = pneg %p216
      %p223 = scmp.eq.s32.totalorder %s24, 1
      %p224 = por %p222, %p223
      %p225 = scmp.ne.s32.totalorder %s217, %s220
      %p226 = scmp.eq.s32.totalorder %s24, 0
      %p227 = por %p225, %p226
      %p228 = scmp.ne.s32.totalorder %s217, %s220
      %p229 = scmp.eq.s32.totalorder %s29, 1
      %p230 = por %p228, %p229
      %p231 = scmp.ne.s32.totalorder %s220, %s221
      %p232 = scmp.eq.s32.totalorder %s29, 0
      %p233 = por %p231, %p232
      %p234 = scmp.ne.s32.totalorder %s220, %s221
      %p235 = scmp.eq.s32.totalorder %s30, 1
      %p236 = por %p234, %p235
      %p238 = scmp.ne.s32.totalorder %s221, %s237
      %p239 = scmp.eq.s32.totalorder %s30, 0
      %p240 = por %p238, %p239
      %s241 = ssub.s32 %s31, %s43
      %p242 = scmp.eq.s32.totalorder %s241, 0
      %s244 = sadd.s32 %s243, 1
      %s245 = scalar_select %p242, %s243, %s244
      %p248 = pneg %p242
      %p249 = scmp.eq.s32.totalorder %s24, 1
      %p250 = por %p248, %p249
      %p251 = scmp.ne.s32.totalorder %s243, %s246
      %p252 = scmp.eq.s32.totalorder %s24, 0
      %p253 = por %p251, %p252
      %p254 = scmp.ne.s32.totalorder %s243, %s246
      %p255 = scmp.eq.s32.totalorder %s29, 1
      %p256 = por %p254, %p255
      %p257 = scmp.ne.s32.totalorder %s246, %s247
      %p258 = scmp.eq.s32.totalorder %s29, 0
      %p259 = por %p257, %p258
      %p260 = scmp.ne.s32.totalorder %s246, %s247
      %p261 = scmp.eq.s32.totalorder %s30, 1
      %p262 = por %p260, %p261
      %p264 = scmp.ne.s32.totalorder %s247, %s263
      %p265 = scmp.eq.s32.totalorder %s30, 0
      %p266 = por %p264, %p265
      %p267 = scmp.le.s32.totalorder 1, %s24
      %p268 = scmp.lt.s32.totalorder %s24, 3
      %p269 = pnand %p267, %p268
      %p270 = pneg %p269
      // Predicated region
      $region9: #{tpu_custom_call.1} parent=5 // pred_check
        _
      $region10: #{tpu_custom_call.1} parent=5 // pred_check_branch
        %272 = sbr.rel (%p269) target = $region12
      $region11: #{tpu_custom_call.1} parent=5 // pred_region
        %s273 = ssub.s32 %s24, 1
        // Predicated region
        $region13: #{tpu_custom_call.1} parent=11 // pred_check
          %p274 = pneg %p90
        $region14: #{tpu_custom_call.1} parent=11 // pred_check_branch
          %276 = sbr.rel (%p274) target = $region16
        $region15: #{tpu_custom_call.1} parent=11 // pred_region
          %s278 = ssub.s32 128, 128
          %279 = vsyncadd [#allocation8], %s278
          %s280 = smul.addr %s33, 128
          %s281 = scalar_lea.hbm %s1, %s280
          %s283 = sshll.u32 [#allocation7], 4
          %s284 = int_to_ptr.vmem [resolvable:$true] %s283
          %286 = dma.hbm_to_vmem [thread:$0]  %s281, 128, %s284, [#allocation8]
        $region16: #{tpu_custom_call.1} parent=11 // pred_fallthru
          _
        // Predicated region
        $region17: #{tpu_custom_call.1} parent=11 // pred_check
          %p287 = pneg %p116
        $region18: #{tpu_custom_call.1} parent=11 // pred_check_branch
          %289 = sbr.rel (%p287) target = $region20
        $region19: #{tpu_custom_call.1} parent=11 // pred_region
          %s291 = ssub.s32 128, 128
          %292 = vsyncadd [#allocation8], %s291
          %s293 = smul.addr %s33, 128
          %s294 = scalar_lea.hbm %s2, %s293
          %s296 = sshll.u32 [#allocation9], 4
          %s297 = int_to_ptr.vmem [resolvable:$true] %s296
          %299 = dma.hbm_to_vmem [thread:$0]  %s294, 128, %s297, [#allocation8]
        $region20: #{tpu_custom_call.1} parent=11 // pred_fallthru
          _
        // Predicated region
        $region21: #{tpu_custom_call.1} parent=11 // pred_check
          %p300 = pneg %p137
        $region22: #{tpu_custom_call.1} parent=11 // pred_check_branch
          %302 = sbr.rel (%p300) target = $region24
        $region23: #{tpu_custom_call.1} parent=11 // pred_region
          %s304 = ssub.s32 8192, 8192
          %305 = vsyncadd [#allocation11], %s304
          %s306 = sshll.u32 [#allocation10], 4
          %s307 = int_to_ptr.vmem [resolvable:$true] %s306
          %312 = dma.hbm_to_vmem [thread:$0]  %s3, 8192, %s307, [#allocation11], 512, 512, 32
        $region24: #{tpu_custom_call.1} parent=11 // pred_fallthru
          _
        // Predicated region
        $region25: #{tpu_custom_call.1} parent=11 // pred_check
          %p313 = pneg %p158
        $region26: #{tpu_custom_call.1} parent=11 // pred_check_branch
          %315 = sbr.rel (%p313) target = $region28
        $region27: #{tpu_custom_call.1} parent=11 // pred_region
          %s317 = ssub.s32 2048, 2048
          %318 = vsyncadd [#allocation11], %s317
          %s319 = sshll.u32 [#allocation12], 4
          %s320 = int_to_ptr.vmem [resolvable:$true] %s319
          %325 = dma.hbm_to_vmem [thread:$0]  %s4, 2048, %s320, [#allocation11], 128, 128, 8
        $region28: #{tpu_custom_call.1} parent=11 // pred_fallthru
          _
        // Predicated region
        $region29: #{tpu_custom_call.1} parent=11 // pred_check
          %p326 = pneg %p179
        $region30: #{tpu_custom_call.1} parent=11 // pred_check_branch
          %328 = sbr.rel (%p326) target = $region32
        $region31: #{tpu_custom_call.1} parent=11 // pred_region
          _
        $region32: #{tpu_custom_call.1} parent=11 // pred_fallthru
          _
      $region12: #{tpu_custom_call.1} parent=5 // pred_fallthru
        _
      %p329 = scmp.lt.s32.totalorder %s24, 2
      // Predicated region
      $region33: #{tpu_custom_call.1} parent=5 // pred_check
        %p330 = pneg %p329
      $region34: #{tpu_custom_call.1} parent=5 // pred_check_branch
        %332 = sbr.rel (%p330) target = $region36
      $region35: #{tpu_custom_call.1} parent=5 // pred_region
        // Predicated region
        $region37: #{tpu_custom_call.1} parent=35 // pred_check
          %p333 = pneg %p58
        $region38: #{tpu_custom_call.1} parent=35 // pred_check_branch
          %335 = sbr.rel (%p333) target = $region40
        $region39: #{tpu_custom_call.1} parent=35 // pred_region
          %s336 = sand.u32 %s48, 1
          %s337 = scalar_lea.sflag [#allocation5], %s336
          %s338 = sand.u32 %s48, 1
          %s339 = smul.addr %s338, 80
          %s340 = scalar_lea.vmem [#allocation4], %s339
          %s341 = smul.u32 4, %s32
          %s343 = ssub.s32 1280, 1280
          %344 = vsyncadd %s337, %s343
          %s345 = smul.addr %s31, 5
          %s346 = smul.addr %s341, 5
          %s347 = sadd.s32 %s345, %s346
          %s348 = smul.addr %s347, 64
          %s349 = scalar_lea.hbm %s0, %s348
          %s350 = sshll.u32 %s340, 4
          %s351 = int_to_ptr.vmem [resolvable:$true] %s350
          %356 = dma.hbm_to_vmem [thread:$0]  %s349, 1280, %s351, %s337, 320, 320, 20
        $region40: #{tpu_custom_call.1} parent=35 // pred_fallthru
          _
      $region36: #{tpu_custom_call.1} parent=5 // pred_fallthru
        _
      %p357 = scmp.le.s32.totalorder 1, %s24
      %p358 = scmp.lt.s32.totalorder %s24, 3
      %p359 = pnand %p357, %p358
      %p360 = pneg %p359
      // Predicated region
      $region41: #{tpu_custom_call.1} parent=5 // pred_check
        _
      $region42: #{tpu_custom_call.1} parent=5 // pred_check_branch
        %362 = sbr.rel (%p359) target = $region44
      $region43: #{tpu_custom_call.1} parent=5 // pred_region
        %s363 = ssub.s32 %s24, 1
        %s364 = sand.u32 %s51, 1
        %s365 = scalar_lea.sflag [#allocation5], %s364
        %s366 = sand.u32 %s51, 1
        %s367 = smul.addr %s366, 80
        %s368 = scalar_lea.vmem [#allocation4], %s367
        // Predicated region
        $region45: #{tpu_custom_call.1} parent=43 // pred_check
          %p369 = pneg %p64
        $region46: #{tpu_custom_call.1} parent=43 // pred_check_branch
          %371 = sbr.rel (%p369) target = $region48
        $region47: #{tpu_custom_call.1} parent=43 // pred_region
          %372 = dma.done %s365, 1280
        $region48: #{tpu_custom_call.1} parent=43 // pred_fallthru
          _
        // Predicated region
        $region49: #{tpu_custom_call.1} parent=43 // pred_check
          %p373 = pneg %p90
        $region50: #{tpu_custom_call.1} parent=43 // pred_check_branch
          %375 = sbr.rel (%p373) target = $region52
        $region51: #{tpu_custom_call.1} parent=43 // pred_region
          %376 = dma.done [#allocation8], 128
        $region52: #{tpu_custom_call.1} parent=43 // pred_fallthru
          _
        // Predicated region
        $region53: #{tpu_custom_call.1} parent=43 // pred_check
          %p377 = pneg %p116
        $region54: #{tpu_custom_call.1} parent=43 // pred_check_branch
          %379 = sbr.rel (%p377) target = $region56
        $region55: #{tpu_custom_call.1} parent=43 // pred_region
          %380 = dma.done [#allocation8], 128
        $region56: #{tpu_custom_call.1} parent=43 // pred_fallthru
          _
        // Predicated region
        $region57: #{tpu_custom_call.1} parent=43 // pred_check
          %p381 = pneg %p137
        $region58: #{tpu_custom_call.1} parent=43 // pred_check_branch
          %383 = sbr.rel (%p381) target = $region60
        $region59: #{tpu_custom_call.1} parent=43 // pred_region
          %384 = dma.done [#allocation11], 8192
        $region60: #{tpu_custom_call.1} parent=43 // pred_fallthru
          _
        // Predicated region
        $region61: #{tpu_custom_call.1} parent=43 // pred_check
          %p385 = pneg %p158
        $region62: #{tpu_custom_call.1} parent=43 // pred_check_branch
          %387 = sbr.rel (%p385) target = $region64
        $region63: #{tpu_custom_call.1} parent=43 // pred_region
          %388 = dma.done [#allocation11], 2048
        $region64: #{tpu_custom_call.1} parent=43 // pred_fallthru
          _
        %s389 = sand.u32 %s51, 1
        %s390 = scalar_lea.sflag [#allocation5], %s389
        %s391 = sand.u32 %s51, 1
        %s392 = smul.addr %s391, 80
        %s393 = scalar_lea.vmem [#allocation4], %s392
        %p394 = pneg %p64
        %p395 = pneg %p61
        %p396 = pneg %p90
        %p397 = pneg %p87
        %p398 = pneg %p116
        %p399 = pneg %p113
        %p400 = pneg %p137
        %p401 = pneg %p134
        %p402 = pneg %p158
        %p403 = pneg %p155
        %p404 = pneg %p179
        %p405 = pneg %p176
        %p406 = pneg %p207
        %p407 = pneg %p204
        %s408 = sand.u32 %s194, 1
        %s409 = scalar_lea.sflag [#allocation6], %s408
        %s410 = sand.u32 %s194, 1
        %s411 = smul.addr %s410, 16
        %s412 = scalar_lea.vmem [#allocation13], %s411
        %p413 = pneg %p233
        %p414 = pneg %p230
        %p415 = pneg %p259
        %p416 = pneg %p256
        %s417 = smul.u32 4, %s34
        %s418 = smul.u32 4, %s34
        %p419 = scmp.eq.s32.totalorder %s34, 0
        // Predicated region
        $region65: #{tpu_custom_call.1} parent=43 // pred_check
          %p420 = pneg %p419
        $region66: #{tpu_custom_call.1} parent=43 // pred_check_branch
          %422 = sbr.rel (%p420) target = $region68
        $region67: #{tpu_custom_call.1} parent=43 // pred_region
          %v423 = vld [vmem:[#allocation7] sm:$0xff]
          %424 = vst [vmem:[#allocation2] sm:$0xff] %v423
          %v425 = vld [vmem:[#allocation9] sm:$0xff]
          %426 = vst [vmem:[#allocation3] sm:$0xff] %v425
        $region68: #{tpu_custom_call.1} parent=43 // pred_fallthru
          _
        %v427 = vld [vmem:[#allocation10] sm:$0xff]
        %v428 = vld [vmem:[#allocation10 + $0x8] sm:$0xff]
        %v429 = vld [vmem:[#allocation10 + $0x10] sm:$0xff]
        %v430 = vld [vmem:[#allocation10 + $0x18] sm:$0xff]
        %v431 = vld [vmem:[#allocation10 + $0x20] sm:$0xff]
        %v432 = vld [vmem:[#allocation10 + $0x28] sm:$0xff]
        %v433 = vld [vmem:[#allocation10 + $0x30] sm:$0xff]
        %v434 = vld [vmem:[#allocation10 + $0x38] sm:$0xff]
        %v435 = vld [vmem:[#allocation10 + $0x40] sm:$0xff]
        %v436 = vld [vmem:[#allocation10 + $0x48] sm:$0xff]
        %v437 = vld [vmem:[#allocation10 + $0x50] sm:$0xff]
        %v438 = vld [vmem:[#allocation10 + $0x58] sm:$0xff]
        %v439 = vld [vmem:[#allocation10 + $0x60] sm:$0xff]
        %v440 = vld [vmem:[#allocation10 + $0x68] sm:$0xff]
        %v441 = vld [vmem:[#allocation10 + $0x70] sm:$0xff]
        %v442 = vld [vmem:[#allocation10 + $0x78] sm:$0xff]
        %v443 = vld [vmem:[#allocation10 + $0x80] sm:$0xff]
        %v444 = vld [vmem:[#allocation10 + $0x88] sm:$0xff]
        %v445 = vld [vmem:[#allocation10 + $0x90] sm:$0xff]
        %v446 = vld [vmem:[#allocation10 + $0x98] sm:$0xff]
        %v447 = vld [vmem:[#allocation10 + $0xa0] sm:$0xff]
        %v448 = vld [vmem:[#allocation10 + $0xa8] sm:$0xff]
        %v449 = vld [vmem:[#allocation10 + $0xb0] sm:$0xff]
        %v450 = vld [vmem:[#allocation10 + $0xb8] sm:$0xff]
        %v451 = vld [vmem:[#allocation10 + $0xc0] sm:$0xff]
        %v452 = vld [vmem:[#allocation10 + $0xc8] sm:$0xff]
        %v453 = vld [vmem:[#allocation10 + $0xd0] sm:$0xff]
        %v454 = vld [vmem:[#allocation10 + $0xd8] sm:$0xff]
        %v455 = vld [vmem:[#allocation10 + $0xe0] sm:$0xff]
        %v456 = vld [vmem:[#allocation10 + $0xe8] sm:$0xff]
        %v457 = vld [vmem:[#allocation10 + $0xf0] sm:$0xff]
        %v458 = vld [vmem:[#allocation10 + $0xf8] sm:$0xff]
        %v459 = vld [vmem:[#allocation10 + $0x100] sm:$0xff]
        %v460 = vld [vmem:[#allocation10 + $0x108] sm:$0xff]
        %v461 = vld [vmem:[#allocation10 + $0x110] sm:$0xff]
        %v462 = vld [vmem:[#allocation10 + $0x118] sm:$0xff]
        %v463 = vld [vmem:[#allocation10 + $0x120] sm:$0xff]
        %v464 = vld [vmem:[#allocation10 + $0x128] sm:$0xff]
        %v465 = vld [vmem:[#allocation10 + $0x130] sm:$0xff]
        %v466 = vld [vmem:[#allocation10 + $0x138] sm:$0xff]
        %v467 = vld [vmem:[#allocation10 + $0x140] sm:$0xff]
        %v468 = vld [vmem:[#allocation10 + $0x148] sm:$0xff]
        %v469 = vld [vmem:[#allocation10 + $0x150] sm:$0xff]
        %v470 = vld [vmem:[#allocation10 + $0x158] sm:$0xff]
        %v471 = vld [vmem:[#allocation10 + $0x160] sm:$0xff]
        %v472 = vld [vmem:[#allocation10 + $0x168] sm:$0xff]
        %v473 = vld [vmem:[#allocation10 + $0x170] sm:$0xff]
        %v474 = vld [vmem:[#allocation10 + $0x178] sm:$0xff]
        %v475 = vld [vmem:[#allocation10 + $0x180] sm:$0xff]
        %v476 = vld [vmem:[#allocation10 + $0x188] sm:$0xff]
        %v477 = vld [vmem:[#allocation10 + $0x190] sm:$0xff]
        %v478 = vld [vmem:[#allocation10 + $0x198] sm:$0xff]
        %v479 = vld [vmem:[#allocation10 + $0x1a0] sm:$0xff]
        %v480 = vld [vmem:[#allocation10 + $0x1a8] sm:$0xff]
        %v481 = vld [vmem:[#allocation10 + $0x1b0] sm:$0xff]
        %v482 = vld [vmem:[#allocation10 + $0x1b8] sm:$0xff]
        %v483 = vld [vmem:[#allocation10 + $0x1c0] sm:$0xff]
        %v484 = vld [vmem:[#allocation10 + $0x1c8] sm:$0xff]
        %v485 = vld [vmem:[#allocation10 + $0x1d0] sm:$0xff]
        %v486 = vld [vmem:[#allocation10 + $0x1d8] sm:$0xff]
        %v487 = vld [vmem:[#allocation10 + $0x1e0] sm:$0xff]
        %v488 = vld [vmem:[#allocation10 + $0x1e8] sm:$0xff]
        %v489 = vld [vmem:[#allocation10 + $0x1f0] sm:$0xff]
        %v490 = vld [vmem:[#allocation10 + $0x1f8] sm:$0xff]
        %v491 = vld [vmem:[#allocation12] sm:$0xff]
        %v492 = vld [vmem:[#allocation12 + $0x8] sm:$0xff]
        %v493 = vld [vmem:[#allocation12 + $0x10] sm:$0xff]
        %v494 = vld [vmem:[#allocation12 + $0x18] sm:$0xff]
        %v495 = vld [vmem:[#allocation12 + $0x20] sm:$0xff]
        %v496 = vld [vmem:[#allocation12 + $0x28] sm:$0xff]
        %v497 = vld [vmem:[#allocation12 + $0x30] sm:$0xff]
        %v498 = vld [vmem:[#allocation12 + $0x38] sm:$0xff]
        %v499 = vld [vmem:[#allocation12 + $0x40] sm:$0xff]
        %v500 = vld [vmem:[#allocation12 + $0x48] sm:$0xff]
        %v501 = vld [vmem:[#allocation12 + $0x50] sm:$0xff]
        %v502 = vld [vmem:[#allocation12 + $0x58] sm:$0xff]
        %v503 = vld [vmem:[#allocation12 + $0x60] sm:$0xff]
        %v504 = vld [vmem:[#allocation12 + $0x68] sm:$0xff]
        %v505 = vld [vmem:[#allocation12 + $0x70] sm:$0xff]
        %v506 = vld [vmem:[#allocation12 + $0x78] sm:$0xff]
        %v507 = vld [vmem:[%s5] sm:$0x1]
        %s508 = smul.u32 %s34, 4
        %p509 = scmp.lt.s32.totalorder %s508, 8
        // Predicated region
        $region69: #{tpu_custom_call.1} parent=43 // pred_check
          %p510 = pneg %p509
        $region70: #{tpu_custom_call.1} parent=43 // pred_check_branch
          %512 = sbr.rel (%p510) target = $region72
        $region71: #{tpu_custom_call.1} parent=43 // pred_region
          %v513 = vld [vmem:[#allocation2] sm:$0xff]
          %v514 = vld [vmem:[#allocation3] sm:$0xff]
          %v515 = vld [vmem:[%s368] sm:$0xff]
          %v516 = vld [vmem:[%s368 + $0x8] sm:$0xff]
          %v517 = vld [vmem:[%s368 + $0x10] sm:$0xf]
          %v518 = vunpack.c.l.bf16 %v515
          %v519 = vunpack.c.h.bf16 %v515
          %v520 = vunpack.c.l.bf16 %v516
          %v521 = vunpack.c.h.bf16 %v516
          %v522 = vunpack.c.l.bf16 %v517
          %v524 = vlaneseq
          %v525 = vshrl.u32 %v524, 7
          %v526 = vsub.s32 0, %v525
          %v527 = vrot.slane %v507, %v526
          %529 = vmatprep.subr.mxu0 0.0
          %530 = vmatpush1.msra.mxu0 %v506
          %531 = vmatprep.subr.mxu0 0.0
          %532 = vmatpush1.msra.mxu0 %v505
          %533 = vmatprep.subr.mxu0 0.0
          %534 = vmatpush1.msra.mxu0 %v504
          %535 = vmatprep.subr.mxu0 0.0
          %536 = vmatpush1.msra.mxu0 %v503
          %537 = vmatprep.subr.mxu0 0.0
          %538 = vmatpush1.msra.mxu0 %v502
          %539 = vmatprep.subr.mxu0 0.0
          %540 = vmatpush1.msra.mxu0 %v501
          %541 = vmatprep.subr.mxu0 0.0
          %542 = vmatpush1.msra.mxu0 %v500
          %543 = vmatprep.subr.mxu0 0.0
          %544 = vmatpush1.msra.mxu0 %v499
          %545 = vmatprep.subr.mxu0 0.0
          %546 = vmatpush1.msra.mxu0 %v498
          %547 = vmatprep.subr.mxu0 0.0
          %548 = vmatpush1.msra.mxu0 %v497
          %549 = vmatprep.subr.mxu0 0.0
          %550 = vmatpush1.msra.mxu0 %v496
          %551 = vmatprep.subr.mxu0 0.0
          %552 = vmatpush1.msra.mxu0 %v495
          %553 = vmatprep.subr.mxu0 0.0
          %554 = vmatpush1.msra.mxu0 %v494
          %555 = vmatprep.subr.mxu0 0.0
          %556 = vmatpush1.msra.mxu0 %v493
          %557 = vmatprep.subr.mxu0 0.0
          %558 = vmatpush1.msra.mxu0 %v492
          %559 = vmatprep.subr.mxu0 0.0
          %560 = vmatpush1.msra.mxu0 %v491
          %561 = vmatprep.subr.mxu0 0.0
          %562 = vmatpush2.msra.mxu0 0.0
          %563 = vmatprep.subr.mxu0 0.0
          %564 = vmatpush2.msra.mxu0 0.0
          %565 = vmatprep.subr.mxu0 0.0
          %566 = vmatpush2.msra.mxu0 0.0
          %567 = vmatprep.subr.mxu0 0.0
          %568 = vmatpush2.msra.mxu0 0.0
          %569 = vmatprep.subr.mxu0 0.0
          %570 = vmatpush2.msra.mxu0 0.0
          %571 = vmatprep.subr.mxu0 0.0
          %572 = vmatpush2.msra.mxu0 0.0
          %573 = vmatprep.subr.mxu0 0.0
          %574 = vmatpush2.msra.mxu0 0.0
          %575 = vmatprep.subr.mxu0 0.0
          %576 = vmatpush2.msra.mxu0 0.0
          %577 = vmatprep.subr.mxu0 0.0
          %578 = vmatpush2.msra.mxu0 0.0
          %579 = vmatprep.subr.mxu0 0.0
          %580 = vmatpush2.msra.mxu0 0.0
          %581 = vmatprep.subr.mxu0 0.0
          %582 = vmatpush2.msra.mxu0 0.0
          %583 = vmatprep.subr.mxu0 0.0
          %584 = vmatpush2.msra.mxu0 0.0
          %585 = vmatprep.subr.mxu0 0.0
          %586 = vmatpush2.msra.mxu0 0.0
          %587 = vmatprep.subr.mxu0 0.0
          %588 = vmatpush2.msra.mxu0 0.0
          %589 = vmatprep.subr.mxu0 0.0
          %590 = vmatpush2.msra.mxu0 0.0
          %591 = vmatprep.subr.mxu0 0.0
          %592 = vmatpush2.msra.mxu0 0.0
          %593 = vmatprep.mubr.f32.mxu0 0.0
          %594 = vmatmul.mubr.f32.gmra.mxu0 %v514
          %v595 = vpop.f32.mrf.mxu0
          %v596 = vadd.f32 %v527, %v595
          %v597 = vpop.f32.mrf.mxu0
          %598 = vdwg.mxu0
          %v599 = vtanh.pop %v596
          %v600 = vsub.f32 %v522, 1.0
          %602 = vset.pattern.permute.xlu0 0
          %603 = vperm.xlu0 %602, %v600
          %v604 = vpop.permute.xlu0 %603
          %v606 = vmul.f32 %v599, %v604
          %v607 = vadd.f32 %v514, %v606
          %608 = vmatprep.subr.mxu0 %v488
          %609 = vmatpush1.msra.mxu0 %v487
          %610 = vmatprep.subr.mxu0 %v484
          %611 = vmatpush1.msra.mxu0 %v483
          %612 = vmatprep.subr.mxu0 %v480
          %613 = vmatpush1.msra.mxu0 %v479
          %614 = vmatprep.subr.mxu0 %v476
          %615 = vmatpush1.msra.mxu0 %v475
          %616 = vmatprep.subr.mxu0 %v472
          %617 = vmatpush1.msra.mxu0 %v471
          %618 = vmatprep.subr.mxu0 %v468
          %619 = vmatpush1.msra.mxu0 %v467
          %620 = vmatprep.subr.mxu0 %v464
          %621 = vmatpush1.msra.mxu0 %v463
          %622 = vmatprep.subr.mxu0 %v460
          %623 = vmatpush1.msra.mxu0 %v459
          %624 = vmatprep.subr.mxu0 %v456
          %625 = vmatpush1.msra.mxu0 %v455
          %626 = vmatprep.subr.mxu0 %v452
          %627 = vmatpush1.msra.mxu0 %v451
          %628 = vmatprep.subr.mxu0 %v448
          %629 = vmatpush1.msra.mxu0 %v447
          %630 = vmatprep.subr.mxu0 %v444
          %631 = vmatpush1.msra.mxu0 %v443
          %632 = vmatprep.subr.mxu0 %v440
          %633 = vmatpush1.msra.mxu0 %v439
          %634 = vmatprep.subr.mxu0 %v436
          %635 = vmatpush1.msra.mxu0 %v435
          %636 = vmatprep.subr.mxu0 %v432
          %637 = vmatpush1.msra.mxu0 %v431
          %638 = vmatprep.subr.mxu0 %v428
          %639 = vmatpush1.msra.mxu0 %v427
          %640 = vmatprep.subr.mxu0 0.0
          %641 = vmatpush2.msra.mxu0 0.0
          %642 = vmatprep.subr.mxu0 0.0
          %643 = vmatpush2.msra.mxu0 0.0
          %644 = vmatprep.subr.mxu0 0.0
          %645 = vmatpush2.msra.mxu0 0.0
          %646 = vmatprep.subr.mxu0 0.0
          %647 = vmatpush2.msra.mxu0 0.0
          %648 = vmatprep.subr.mxu0 0.0
          %649 = vmatpush2.msra.mxu0 0.0
          %650 = vmatprep.subr.mxu0 0.0
          %651 = vmatpush2.msra.mxu0 0.0
          %652 = vmatprep.subr.mxu0 0.0
          %653 = vmatpush2.msra.mxu0 0.0
          %654 = vmatprep.subr.mxu0 0.0
          %655 = vmatpush2.msra.mxu0 0.0
          %656 = vmatprep.subr.mxu0 0.0
          %657 = vmatpush2.msra.mxu0 0.0
          %658 = vmatprep.subr.mxu0 0.0
          %659 = vmatpush2.msra.mxu0 0.0
          %660 = vmatprep.subr.mxu0 0.0
          %661 = vmatpush2.msra.mxu0 0.0
          %662 = vmatprep.subr.mxu0 0.0
          %663 = vmatpush2.msra.mxu0 0.0
          %664 = vmatprep.subr.mxu0 0.0
          %665 = vmatpush2.msra.mxu0 0.0
          %666 = vmatprep.subr.mxu0 0.0
          %667 = vmatpush2.msra.mxu0 0.0
          %668 = vmatprep.subr.mxu0 0.0
          %669 = vmatpush2.msra.mxu0 0.0
          %670 = vmatprep.subr.mxu0 0.0
          %671 = vmatpush2.msra.mxu0 0.0
          %672 = vmatprep.mubr.f32.mxu0 0.0
          %673 = vmatmul.mubr.f32.gmra.mxu0 %v513
          %v674 = vpop.f32.mrf.mxu0
          %v675 = vadd.f32 %v518, %v674
          %v676 = vpop.f32.mrf.mxu0
          %v677 = vadd.f32 %v519, %v676
          %678 = vdwg.mxu0
          %679 = vmatprep.subr.mxu0 %v490
          %680 = vmatpush1.msra.mxu0 %v489
          %681 = vmatprep.subr.mxu0 %v486
          %682 = vmatpush1.msra.mxu0 %v485
          %683 = vmatprep.subr.mxu0 %v482
          %684 = vmatpush1.msra.mxu0 %v481
          %685 = vmatprep.subr.mxu0 %v478
          %686 = vmatpush1.msra.mxu0 %v477
          %687 = vmatprep.subr.mxu0 %v474
          %688 = vmatpush1.msra.mxu0 %v473
          %689 = vmatprep.subr.mxu0 %v470
          %690 = vmatpush1.msra.mxu0 %v469
          %691 = vmatprep.subr.mxu0 %v466
          %692 = vmatpush1.msra.mxu0 %v465
          %693 = vmatprep.subr.mxu0 %v462
          %694 = vmatpush1.msra.mxu0 %v461
          %695 = vmatprep.subr.mxu0 %v458
          %696 = vmatpush1.msra.mxu0 %v457
          %697 = vmatprep.subr.mxu0 %v454
          %698 = vmatpush1.msra.mxu0 %v453
          %699 = vmatprep.subr.mxu0 %v450
          %700 = vmatpush1.msra.mxu0 %v449
          %701 = vmatprep.subr.mxu0 %v446
          %702 = vmatpush1.msra.mxu0 %v445
          %703 = vmatprep.subr.mxu0 %v442
          %704 = vmatpush1.msra.mxu0 %v441
          %705 = vmatprep.subr.mxu0 %v438
          %706 = vmatpush1.msra.mxu0 %v437
          %707 = vmatprep.subr.mxu0 %v434
          %708 = vmatpush1.msra.mxu0 %v433
          %709 = vmatprep.subr.mxu0 %v430
          %710 = vmatpush1.msra.mxu0 %v429
          %711 = vmatprep.subr.mxu0 0.0
          %712 = vmatpush2.msra.mxu0 0.0
          %713 = vmatprep.subr.mxu0 0.0
          %714 = vmatpush2.msra.mxu0 0.0
          %715 = vmatprep.subr.mxu0 0.0
          %716 = vmatpush2.msra.mxu0 0.0
          %717 = vmatprep.subr.mxu0 0.0
          %718 = vmatpush2.msra.mxu0 0.0
          %719 = vmatprep.subr.mxu0 0.0
          %720 = vmatpush2.msra.mxu0 0.0
          %721 = vmatprep.subr.mxu0 0.0
          %722 = vmatpush2.msra.mxu0 0.0
          %723 = vmatprep.subr.mxu0 0.0
          %724 = vmatpush2.msra.mxu0 0.0
          %725 = vmatprep.subr.mxu0 0.0
          %726 = vmatpush2.msra.mxu0 0.0
          %727 = vmatprep.subr.mxu0 0.0
          %728 = vmatpush2.msra.mxu0 0.0
          %729 = vmatprep.subr.mxu0 0.0
          %730 = vmatpush2.msra.mxu0 0.0
          %731 = vmatprep.subr.mxu0 0.0
          %732 = vmatpush2.msra.mxu0 0.0
          %733 = vmatprep.subr.mxu0 0.0
          %734 = vmatpush2.msra.mxu0 0.0
          %735 = vmatprep.subr.mxu0 0.0
          %736 = vmatpush2.msra.mxu0 0.0
          %737 = vmatprep.subr.mxu0 0.0
          %738 = vmatpush2.msra.mxu0 0.0
          %739 = vmatprep.subr.mxu0 0.0
          %740 = vmatpush2.msra.mxu0 0.0
          %741 = vmatprep.subr.mxu0 0.0
          %742 = vmatpush2.msra.mxu0 0.0
          %743 = vmatprep.mubr.f32.mxu0 0.0
          %744 = vmatmul.mubr.f32.gmra.mxu0 %v513
          %v745 = vpop.f32.mrf.mxu0
          %v746 = vadd.f32 %v520, %v745
          %v747 = vpop.f32.mrf.mxu0
          %v748 = vadd.f32 %v521, %v747
          %749 = vdwg.mxu0
          %v750 = vxor.u32 %v675, 2147483648
          %v751 = vmul.f32 %v750, 1.442695
          %v752 = vpow.pop %v751
          %v753 = vadd.f32 %v752, 1.0
          %v754 = vrcp.pop %v753
          %v755 = vmul.f32 1.0, %v754
          %v756 = vxor.u32 %v677, 2147483648
          %v757 = vmul.f32 %v756, 1.442695
          %v758 = vpow.pop %v757
          %v759 = vadd.f32 %v758, 1.0
          %v760 = vrcp.pop %v759
          %v761 = vmul.f32 1.0, %v760
          %v762 = vxor.u32 %v746, 2147483648
          %v763 = vmul.f32 %v762, 1.442695
          %v764 = vpow.pop %v763
          %v765 = vadd.f32 %v764, 1.0
          %v766 = vrcp.pop %v765
          %v767 = vmul.f32 1.0, %v766
          %v768 = vxor.u32 %v748, 2147483648
          %v769 = vmul.f32 %v768, 1.442695
          %v770 = vpow.pop %v769
          %v771 = vadd.f32 %v770, 1.0
          %v772 = vrcp.pop %v771
          %v773 = vmul.f32 1.0, %v772
          %v774 = vmul.f32 %v755, %v607
          %v775 = vmul.f32 %v761, %v773
          %v776 = vadd.f32 %v774, %v775
          %v777 = vtanh.pop %v776
          %v778 = vmul.f32 %v767, %v777
          %779 = vst [vmem:[#allocation2] sm:$0xff] %v778
          %780 = vst [vmem:[#allocation3] sm:$0xff] %v776
          %v781 = vpack.c.bf16 %v767, %v767
          %782 = vst [vmem:[%s412] sm:$0xf] %v781
        $region72: #{tpu_custom_call.1} parent=43 // pred_fallthru
          _
        %s783 = sadd.s32 %s508, 1
        %p784 = scmp.lt.s32.totalorder %s783, 8
        // Predicated region
        $region73: #{tpu_custom_call.1} parent=43 // pred_check
          %p785 = pneg %p784
        $region74: #{tpu_custom_call.1} parent=43 // pred_check_branch
          %787 = sbr.rel (%p785) target = $region76
        $region75: #{tpu_custom_call.1} parent=43 // pred_region
          %v788 = vld [vmem:[#allocation2] sm:$0xff]
          %v789 = vld [vmem:[#allocation3] sm:$0xff]
          %s790 = scalar_lea.vmem %s368, 20 [#allocation4]
          %v791 = vld [vmem:[%s790] sm:$0xff]
          %v792 = vld [vmem:[%s790 + $0x8] sm:$0xff]
          %v793 = vld [vmem:[%s790 + $0x10] sm:$0xf]
          %v794 = vunpack.c.l.bf16 %v791
          %v795 = vunpack.c.h.bf16 %v791
          %v796 = vunpack.c.l.bf16 %v792
          %v797 = vunpack.c.h.bf16 %v792
          %v798 = vunpack.c.l.bf16 %v793
          %v800 = vlaneseq
          %v801 = vshrl.u32 %v800, 7
          %v802 = vsub.s32 0, %v801
          %v803 = vrot.slane %v507, %v802
          %805 = vmatprep.subr.mxu0 0.0
          %806 = vmatpush1.msra.mxu0 %v506
          %807 = vmatprep.subr.mxu0 0.0
          %808 = vmatpush1.msra.mxu0 %v505
          %809 = vmatprep.subr.mxu0 0.0
          %810 = vmatpush1.msra.mxu0 %v504
          %811 = vmatprep.subr.mxu0 0.0
          %812 = vmatpush1.msra.mxu0 %v503
          %813 = vmatprep.subr.mxu0 0.0
          %814 = vmatpush1.msra.mxu0 %v502
          %815 = vmatprep.subr.mxu0 0.0
          %816 = vmatpush1.msra.mxu0 %v501
          %817 = vmatprep.subr.mxu0 0.0
          %818 = vmatpush1.msra.mxu0 %v500
          %819 = vmatprep.subr.mxu0 0.0
          %820 = vmatpush1.msra.mxu0 %v499
          %821 = vmatprep.subr.mxu0 0.0
          %822 = vmatpush1.msra.mxu0 %v498
          %823 = vmatprep.subr.mxu0 0.0
          %824 = vmatpush1.msra.mxu0 %v497
          %825 = vmatprep.subr.mxu0 0.0
          %826 = vmatpush1.msra.mxu0 %v496
          %827 = vmatprep.subr.mxu0 0.0
          %828 = vmatpush1.msra.mxu0 %v495
          %829 = vmatprep.subr.mxu0 0.0
          %830 = vmatpush1.msra.mxu0 %v494
          %831 = vmatprep.subr.mxu0 0.0
          %832 = vmatpush1.msra.mxu0 %v493
          %833 = vmatprep.subr.mxu0 0.0
          %834 = vmatpush1.msra.mxu0 %v492
          %835 = vmatprep.subr.mxu0 0.0
          %836 = vmatpush1.msra.mxu0 %v491
          %837 = vmatprep.subr.mxu0 0.0
          %838 = vmatpush2.msra.mxu0 0.0
          %839 = vmatprep.subr.mxu0 0.0
          %840 = vmatpush2.msra.mxu0 0.0
          %841 = vmatprep.subr.mxu0 0.0
          %842 = vmatpush2.msra.mxu0 0.0
          %843 = vmatprep.subr.mxu0 0.0
          %844 = vmatpush2.msra.mxu0 0.0
          %845 = vmatprep.subr.mxu0 0.0
          %846 = vmatpush2.msra.mxu0 0.0
          %847 = vmatprep.subr.mxu0 0.0
          %848 = vmatpush2.msra.mxu0 0.0
          %849 = vmatprep.subr.mxu0 0.0
          %850 = vmatpush2.msra.mxu0 0.0
          %851 = vmatprep.subr.mxu0 0.0
          %852 = vmatpush2.msra.mxu0 0.0
          %853 = vmatprep.subr.mxu0 0.0
          %854 = vmatpush2.msra.mxu0 0.0
          %855 = vmatprep.subr.mxu0 0.0
          %856 = vmatpush2.msra.mxu0 0.0
          %857 = vmatprep.subr.mxu0 0.0
          %858 = vmatpush2.msra.mxu0 0.0
          %859 = vmatprep.subr.mxu0 0.0
          %860 = vmatpush2.msra.mxu0 0.0
          %861 = vmatprep.subr.mxu0 0.0
          %862 = vmatpush2.msra.mxu0 0.0
          %863 = vmatprep.subr.mxu0 0.0
          %864 = vmatpush2.msra.mxu0 0.0
          %865 = vmatprep.subr.mxu0 0.0
          %866 = vmatpush2.msra.mxu0 0.0
          %867 = vmatprep.subr.mxu0 0.0
          %868 = vmatpush2.msra.mxu0 0.0
          %869 = vmatprep.mubr.f32.mxu0 0.0
          %870 = vmatmul.mubr.f32.gmra.mxu0 %v789
          %v871 = vpop.f32.mrf.mxu0
          %v872 = vadd.f32 %v803, %v871
          %v873 = vpop.f32.mrf.mxu0
          %874 = vdwg.mxu0
          %v875 = vtanh.pop %v872
          %v876 = vsub.f32 %v798, 1.0
          %878 = vset.pattern.permute.xlu0 0
          %879 = vperm.xlu0 %878, %v876
          %v880 = vpop.permute.xlu0 %879
          %v882 = vmul.f32 %v875, %v880
          %v883 = vadd.f32 %v789, %v882
          %884 = vmatprep.subr.mxu0 %v488
          %885 = vmatpush1.msra.mxu0 %v487
          %886 = vmatprep.subr.mxu0 %v484
          %887 = vmatpush1.msra.mxu0 %v483
          %888 = vmatprep.subr.mxu0 %v480
          %889 = vmatpush1.msra.mxu0 %v479
          %890 = vmatprep.subr.mxu0 %v476
          %891 = vmatpush1.msra.mxu0 %v475
          %892 = vmatprep.subr.mxu0 %v472
          %893 = vmatpush1.msra.mxu0 %v471
          %894 = vmatprep.subr.mxu0 %v468
          %895 = vmatpush1.msra.mxu0 %v467
          %896 = vmatprep.subr.mxu0 %v464
          %897 = vmatpush1.msra.mxu0 %v463
          %898 = vmatprep.subr.mxu0 %v460
          %899 = vmatpush1.msra.mxu0 %v459
          %900 = vmatprep.subr.mxu0 %v456
          %901 = vmatpush1.msra.mxu0 %v455
          %902 = vmatprep.subr.mxu0 %v452
          %903 = vmatpush1.msra.mxu0 %v451
          %904 = vmatprep.subr.mxu0 %v448
          %905 = vmatpush1.msra.mxu0 %v447
          %906 = vmatprep.subr.mxu0 %v444
          %907 = vmatpush1.msra.mxu0 %v443
          %908 = vmatprep.subr.mxu0 %v440
          %909 = vmatpush1.msra.mxu0 %v439
          %910 = vmatprep.subr.mxu0 %v436
          %911 = vmatpush1.msra.mxu0 %v435
          %912 = vmatprep.subr.mxu0 %v432
          %913 = vmatpush1.msra.mxu0 %v431
          %914 = vmatprep.subr.mxu0 %v428
          %915 = vmatpush1.msra.mxu0 %v427
          %916 = vmatprep.subr.mxu0 0.0
          %917 = vmatpush2.msra.mxu0 0.0
          %918 = vmatprep.subr.mxu0 0.0
          %919 = vmatpush2.msra.mxu0 0.0
          %920 = vmatprep.subr.mxu0 0.0
          %921 = vmatpush2.msra.mxu0 0.0
          %922 = vmatprep.subr.mxu0 0.0
          %923 = vmatpush2.msra.mxu0 0.0
          %924 = vmatprep.subr.mxu0 0.0
          %925 = vmatpush2.msra.mxu0 0.0
          %926 = vmatprep.subr.mxu0 0.0
          %927 = vmatpush2.msra.mxu0 0.0
          %928 = vmatprep.subr.mxu0 0.0
          %929 = vmatpush2.msra.mxu0 0.0
          %930 = vmatprep.subr.mxu0 0.0
          %931 = vmatpush2.msra.mxu0 0.0
          %932 = vmatprep.subr.mxu0 0.0
          %933 = vmatpush2.msra.mxu0 0.0
          %934 = vmatprep.subr.mxu0 0.0
          %935 = vmatpush2.msra.mxu0 0.0
          %936 = vmatprep.subr.mxu0 0.0
          %937 = vmatpush2.msra.mxu0 0.0
          %938 = vmatprep.subr.mxu0 0.0
          %939 = vmatpush2.msra.mxu0 0.0
          %940 = vmatprep.subr.mxu0 0.0
          %941 = vmatpush2.msra.mxu0 0.0
          %942 = vmatprep.subr.mxu0 0.0
          %943 = vmatpush2.msra.mxu0 0.0
          %944 = vmatprep.subr.mxu0 0.0
          %945 = vmatpush2.msra.mxu0 0.0
          %946 = vmatprep.subr.mxu0 0.0
          %947 = vmatpush2.msra.mxu0 0.0
          %948 = vmatprep.mubr.f32.mxu0 0.0
          %949 = vmatmul.mubr.f32.gmra.mxu0 %v788
          %v950 = vpop.f32.mrf.mxu0
          %v951 = vadd.f32 %v794, %v950
          %v952 = vpop.f32.mrf.mxu0
          %v953 = vadd.f32 %v795, %v952
          %954 = vdwg.mxu0
          %955 = vmatprep.subr.mxu0 %v490
          %956 = vmatpush1.msra.mxu0 %v489
          %957 = vmatprep.subr.mxu0 %v486
          %958 = vmatpush1.msra.mxu0 %v485
          %959 = vmatprep.subr.mxu0 %v482
          %960 = vmatpush1.msra.mxu0 %v481
          %961 = vmatprep.subr.mxu0 %v478
          %962 = vmatpush1.msra.mxu0 %v477
          %963 = vmatprep.subr.mxu0 %v474
          %964 = vmatpush1.msra.mxu0 %v473
          %965 = vmatprep.subr.mxu0 %v470
          %966 = vmatpush1.msra.mxu0 %v469
          %967 = vmatprep.subr.mxu0 %v466
          %968 = vmatpush1.msra.mxu0 %v465
          %969 = vmatprep.subr.mxu0 %v462
          %970 = vmatpush1.msra.mxu0 %v461
          %971 = vmatprep.subr.mxu0 %v458
          %972 = vmatpush1.msra.mxu0 %v457
          %973 = vmatprep.subr.mxu0 %v454
          %974 = vmatpush1.msra.mxu0 %v453
          %975 = vmatprep.subr.mxu0 %v450
          %976 = vmatpush1.msra.mxu0 %v449
          %977 = vmatprep.subr.mxu0 %v446
          %978 = vmatpush1.msra.mxu0 %v445
          %979 = vmatprep.subr.mxu0 %v442
          %980 = vmatpush1.msra.mxu0 %v441
          %981 = vmatprep.subr.mxu0 %v438
          %982 = vmatpush1.msra.mxu0 %v437
          %983 = vmatprep.subr.mxu0 %v434
          %984 = vmatpush1.msra.mxu0 %v433
          %985 = vmatprep.subr.mxu0 %v430
          %986 = vmatpush1.msra.mxu0 %v429
          %987 = vmatprep.subr.mxu0 0.0
          %988 = vmatpush2.msra.mxu0 0.0
          %989 = vmatprep.subr.mxu0 0.0
          %990 = vmatpush2.msra.mxu0 0.0
          %991 = vmatprep.subr.mxu0 0.0
          %992 = vmatpush2.msra.mxu0 0.0
          %993 = vmatprep.subr.mxu0 0.0
          %994 = vmatpush2.msra.mxu0 0.0
          %995 = vmatprep.subr.mxu0 0.0
          %996 = vmatpush2.msra.mxu0 0.0
          %997 = vmatprep.subr.mxu0 0.0
          %998 = vmatpush2.msra.mxu0 0.0
          %999 = vmatprep.subr.mxu0 0.0
          %1000 = vmatpush2.msra.mxu0 0.0
          %1001 = vmatprep.subr.mxu0 0.0
          %1002 = vmatpush2.msra.mxu0 0.0
          %1003 = vmatprep.subr.mxu0 0.0
          %1004 = vmatpush2.msra.mxu0 0.0
          %1005 = vmatprep.subr.mxu0 0.0
          %1006 = vmatpush2.msra.mxu0 0.0
          %1007 = vmatprep.subr.mxu0 0.0
          %1008 = vmatpush2.msra.mxu0 0.0
          %1009 = vmatprep.subr.mxu0 0.0
          %1010 = vmatpush2.msra.mxu0 0.0
          %1011 = vmatprep.subr.mxu0 0.0
          %1012 = vmatpush2.msra.mxu0 0.0
          %1013 = vmatprep.subr.mxu0 0.0
          %1014 = vmatpush2.msra.mxu0 0.0
          %1015 = vmatprep.subr.mxu0 0.0
          %1016 = vmatpush2.msra.mxu0 0.0
          %1017 = vmatprep.subr.mxu0 0.0
          %1018 = vmatpush2.msra.mxu0 0.0
          %1019 = vmatprep.mubr.f32.mxu0 0.0
          %1020 = vmatmul.mubr.f32.gmra.mxu0 %v788
          %v1021 = vpop.f32.mrf.mxu0
          %v1022 = vadd.f32 %v796, %v1021
          %v1023 = vpop.f32.mrf.mxu0
          %v1024 = vadd.f32 %v797, %v1023
          %1025 = vdwg.mxu0
          %v1026 = vxor.u32 %v951, 2147483648
          %v1027 = vmul.f32 %v1026, 1.442695
          %v1028 = vpow.pop %v1027
          %v1029 = vadd.f32 %v1028, 1.0
          %v1030 = vrcp.pop %v1029
          %v1031 = vmul.f32 1.0, %v1030
          %v1032 = vxor.u32 %v953, 2147483648
          %v1033 = vmul.f32 %v1032, 1.442695
          %v1034 = vpow.pop %v1033
          %v1035 = vadd.f32 %v1034, 1.0
          %v1036 = vrcp.pop %v1035
          %v1037 = vmul.f32 1.0, %v1036
          %v1038 = vxor.u32 %v1022, 2147483648
          %v1039 = vmul.f32 %v1038, 1.442695
          %v1040 = vpow.pop %v1039
          %v1041 = vadd.f32 %v1040, 1.0
          %v1042 = vrcp.pop %v1041
          %v1043 = vmul.f32 1.0, %v1042
          %v1044 = vxor.u32 %v1024, 2147483648
          %v1045 = vmul.f32 %v1044, 1.442695
          %v1046 = vpow.pop %v1045
          %v1047 = vadd.f32 %v1046, 1.0
          %v1048 = vrcp.pop %v1047
          %v1049 = vmul.f32 1.0, %v1048
          %v1050 = vmul.f32 %v1031, %v883
          %v1051 = vmul.f32 %v1037, %v1049
          %v1052 = vadd.f32 %v1050, %v1051
          %v1053 = vtanh.pop %v1052
          %v1054 = vmul.f32 %v1043, %v1053
          %1055 = vst [vmem:[#allocation2] sm:$0xff] %v1054
          %1056 = vst [vmem:[#allocation3] sm:$0xff] %v1052
          %v1057 = vpack.c.bf16 %v1043, %v1043
          %s1058 = scalar_lea.vmem %s412, 4 [#allocation13]
          %1059 = vst [vmem:[%s1058] sm:$0xf] %v1057
        $region76: #{tpu_custom_call.1} parent=43 // pred_fallthru
          _
        %s1060 = sadd.s32 %s508, 2
        %p1061 = scmp.lt.s32.totalorder %s1060, 8
        // Predicated region
        $region77: #{tpu_custom_call.1} parent=43 // pred_check
          %p1062 = pneg %p1061
        $region78: #{tpu_custom_call.1} parent=43 // pred_check_branch
          %1064 = sbr.rel (%p1062) target = $region80
        $region79: #{tpu_custom_call.1} parent=43 // pred_region
          %v1065 = vld [vmem:[#allocation2] sm:$0xff]
          %v1066 = vld [vmem:[#allocation3] sm:$0xff]
          %s1067 = scalar_lea.vmem %s368, 40 [#allocation4]
          %v1068 = vld [vmem:[%s1067] sm:$0xff]
          %v1069 = vld [vmem:[%s1067 + $0x8] sm:$0xff]
          %v1070 = vld [vmem:[%s1067 + $0x10] sm:$0xf]
          %v1071 = vunpack.c.l.bf16 %v1068
          %v1072 = vunpack.c.h.bf16 %v1068
          %v1073 = vunpack.c.l.bf16 %v1069
          %v1074 = vunpack.c.h.bf16 %v1069
          %v1075 = vunpack.c.l.bf16 %v1070
          %v1077 = vlaneseq
          %v1078 = vshrl.u32 %v1077, 7
          %v1079 = vsub.s32 0, %v1078
          %v1080 = vrot.slane %v507, %v1079
          %1082 = vmatprep.subr.mxu0 0.0
          %1083 = vmatpush1.msra.mxu0 %v506
          %1084 = vmatprep.subr.mxu0 0.0
          %1085 = vmatpush1.msra.mxu0 %v505
          %1086 = vmatprep.subr.mxu0 0.0
          %1087 = vmatpush1.msra.mxu0 %v504
          %1088 = vmatprep.subr.mxu0 0.0
          %1089 = vmatpush1.msra.mxu0 %v503
          %1090 = vmatprep.subr.mxu0 0.0
          %1091 = vmatpush1.msra.mxu0 %v502
          %1092 = vmatprep.subr.mxu0 0.0
          %1093 = vmatpush1.msra.mxu0 %v501
          %1094 = vmatprep.subr.mxu0 0.0
          %1095 = vmatpush1.msra.mxu0 %v500
          %1096 = vmatprep.subr.mxu0 0.0
          %1097 = vmatpush1.msra.mxu0 %v499
          %1098 = vmatprep.subr.mxu0 0.0
          %1099 = vmatpush1.msra.mxu0 %v498
          %1100 = vmatprep.subr.mxu0 0.0
          %1101 = vmatpush1.msra.mxu0 %v497
          %1102 = vmatprep.subr.mxu0 0.0
          %1103 = vmatpush1.msra.mxu0 %v496
          %1104 = vmatprep.subr.mxu0 0.0
          %1105 = vmatpush1.msra.mxu0 %v495
          %1106 = vmatprep.subr.mxu0 0.0
          %1107 = vmatpush1.msra.mxu0 %v494
          %1108 = vmatprep.subr.mxu0 0.0
          %1109 = vmatpush1.msra.mxu0 %v493
          %1110 = vmatprep.subr.mxu0 0.0
          %1111 = vmatpush1.msra.mxu0 %v492
          %1112 = vmatprep.subr.mxu0 0.0
          %1113 = vmatpush1.msra.mxu0 %v491
          %1114 = vmatprep.subr.mxu0 0.0
          %1115 = vmatpush2.msra.mxu0 0.0
          %1116 = vmatprep.subr.mxu0 0.0
          %1117 = vmatpush2.msra.mxu0 0.0
          %1118 = vmatprep.subr.mxu0 0.0
          %1119 = vmatpush2.msra.mxu0 0.0
          %1120 = vmatprep.subr.mxu0 0.0
          %1121 = vmatpush2.msra.mxu0 0.0
          %1122 = vmatprep.subr.mxu0 0.0
          %1123 = vmatpush2.msra.mxu0 0.0
          %1124 = vmatprep.subr.mxu0 0.0
          %1125 = vmatpush2.msra.mxu0 0.0
          %1126 = vmatprep.subr.mxu0 0.0
          %1127 = vmatpush2.msra.mxu0 0.0
          %1128 = vmatprep.subr.mxu0 0.0
          %1129 = vmatpush2.msra.mxu0 0.0
          %1130 = vmatprep.subr.mxu0 0.0
          %1131 = vmatpush2.msra.mxu0 0.0
          %1132 = vmatprep.subr.mxu0 0.0
          %1133 = vmatpush2.msra.mxu0 0.0
          %1134 = vmatprep.subr.mxu0 0.0
          %1135 = vmatpush2.msra.mxu0 0.0
          %1136 = vmatprep.subr.mxu0 0.0
          %1137 = vmatpush2.msra.mxu0 0.0
          %1138 = vmatprep.subr.mxu0 0.0
          %1139 = vmatpush2.msra.mxu0 0.0
          %1140 = vmatprep.subr.mxu0 0.0
          %1141 = vmatpush2.msra.mxu0 0.0
          %1142 = vmatprep.subr.mxu0 0.0
          %1143 = vmatpush2.msra.mxu0 0.0
          %1144 = vmatprep.subr.mxu0 0.0
          %1145 = vmatpush2.msra.mxu0 0.0
          %1146 = vmatprep.mubr.f32.mxu0 0.0
          %1147 = vmatmul.mubr.f32.gmra.mxu0 %v1066
          %v1148 = vpop.f32.mrf.mxu0
          %v1149 = vadd.f32 %v1080, %v1148
          %v1150 = vpop.f32.mrf.mxu0
          %1151 = vdwg.mxu0
          %v1152 = vtanh.pop %v1149
          %v1153 = vsub.f32 %v1075, 1.0
          %1155 = vset.pattern.permute.xlu0 0
          %1156 = vperm.xlu0 %1155, %v1153
          %v1157 = vpop.permute.xlu0 %1156
          %v1159 = vmul.f32 %v1152, %v1157
          %v1160 = vadd.f32 %v1066, %v1159
          %1161 = vmatprep.subr.mxu0 %v488
          %1162 = vmatpush1.msra.mxu0 %v487
          %1163 = vmatprep.subr.mxu0 %v484
          %1164 = vmatpush1.msra.mxu0 %v483
          %1165 = vmatprep.subr.mxu0 %v480
          %1166 = vmatpush1.msra.mxu0 %v479
          %1167 = vmatprep.subr.mxu0 %v476
          %1168 = vmatpush1.msra.mxu0 %v475
          %1169 = vmatprep.subr.mxu0 %v472
          %1170 = vmatpush1.msra.mxu0 %v471
          %1171 = vmatprep.subr.mxu0 %v468
          %1172 = vmatpush1.msra.mxu0 %v467
          %1173 = vmatprep.subr.mxu0 %v464
          %1174 = vmatpush1.msra.mxu0 %v463
          %1175 = vmatprep.subr.mxu0 %v460
          %1176 = vmatpush1.msra.mxu0 %v459
          %1177 = vmatprep.subr.mxu0 %v456
          %1178 = vmatpush1.msra.mxu0 %v455
          %1179 = vmatprep.subr.mxu0 %v452
          %1180 = vmatpush1.msra.mxu0 %v451
          %1181 = vmatprep.subr.mxu0 %v448
          %1182 = vmatpush1.msra.mxu0 %v447
          %1183 = vmatprep.subr.mxu0 %v444
          %1184 = vmatpush1.msra.mxu0 %v443
          %1185 = vmatprep.subr.mxu0 %v440
          %1186 = vmatpush1.msra.mxu0 %v439
          %1187 = vmatprep.subr.mxu0 %v436
          %1188 = vmatpush1.msra.mxu0 %v435
          %1189 = vmatprep.subr.mxu0 %v432
          %1190 = vmatpush1.msra.mxu0 %v431
          %1191 = vmatprep.subr.mxu0 %v428
          %1192 = vmatpush1.msra.mxu0 %v427
          %1193 = vmatprep.subr.mxu0 0.0
          %1194 = vmatpush2.msra.mxu0 0.0
          %1195 = vmatprep.subr.mxu0 0.0
          %1196 = vmatpush2.msra.mxu0 0.0
          %1197 = vmatprep.subr.mxu0 0.0
          %1198 = vmatpush2.msra.mxu0 0.0
          %1199 = vmatprep.subr.mxu0 0.0
          %1200 = vmatpush2.msra.mxu0 0.0
          %1201 = vmatprep.subr.mxu0 0.0
          %1202 = vmatpush2.msra.mxu0 0.0
          %1203 = vmatprep.subr.mxu0 0.0
          %1204 = vmatpush2.msra.mxu0 0.0
          %1205 = vmatprep.subr.mxu0 0.0
          %1206 = vmatpush2.msra.mxu0 0.0
          %1207 = vmatprep.subr.mxu0 0.0
          %1208 = vmatpush2.msra.mxu0 0.0
          %1209 = vmatprep.subr.mxu0 0.0
          %1210 = vmatpush2.msra.mxu0 0.0
          %1211 = vmatprep.subr.mxu0 0.0
          %1212 = vmatpush2.msra.mxu0 0.0
          %1213 = vmatprep.subr.mxu0 0.0
          %1214 = vmatpush2.msra.mxu0 0.0
          %1215 = vmatprep.subr.mxu0 0.0
          %1216 = vmatpush2.msra.mxu0 0.0
          %1217 = vmatprep.subr.mxu0 0.0
          %1218 = vmatpush2.msra.mxu0 0.0
          %1219 = vmatprep.subr.mxu0 0.0
          %1220 = vmatpush2.msra.mxu0 0.0
          %1221 = vmatprep.subr.mxu0 0.0
          %1222 = vmatpush2.msra.mxu0 0.0
          %1223 = vmatprep.subr.mxu0 0.0
          %1224 = vmatpush2.msra.mxu0 0.0
          %1225 = vmatprep.mubr.f32.mxu0 0.0
          %1226 = vmatmul.mubr.f32.gmra.mxu0 %v1065
          %v1227 = vpop.f32.mrf.mxu0
          %v1228 = vadd.f32 %v1071, %v1227
          %v1229 = vpop.f32.mrf.mxu0
          %v1230 = vadd.f32 %v1072, %v1229
          %1231 = vdwg.mxu0
          %1232 = vmatprep.subr.mxu0 %v490
          %1233 = vmatpush1.msra.mxu0 %v489
          %1234 = vmatprep.subr.mxu0 %v486
          %1235 = vmatpush1.msra.mxu0 %v485
          %1236 = vmatprep.subr.mxu0 %v482
          %1237 = vmatpush1.msra.mxu0 %v481
          %1238 = vmatprep.subr.mxu0 %v478
          %1239 = vmatpush1.msra.mxu0 %v477
          %1240 = vmatprep.subr.mxu0 %v474
          %1241 = vmatpush1.msra.mxu0 %v473
          %1242 = vmatprep.subr.mxu0 %v470
          %1243 = vmatpush1.msra.mxu0 %v469
          %1244 = vmatprep.subr.mxu0 %v466
          %1245 = vmatpush1.msra.mxu0 %v465
          %1246 = vmatprep.subr.mxu0 %v462
          %1247 = vmatpush1.msra.mxu0 %v461
          %1248 = vmatprep.subr.mxu0 %v458
          %1249 = vmatpush1.msra.mxu0 %v457
          %1250 = vmatprep.subr.mxu0 %v454
          %1251 = vmatpush1.msra.mxu0 %v453
          %1252 = vmatprep.subr.mxu0 %v450
          %1253 = vmatpush1.msra.mxu0 %v449
          %1254 = vmatprep.subr.mxu0 %v446
          %1255 = vmatpush1.msra.mxu0 %v445
          %1256 = vmatprep.subr.mxu0 %v442
          %1257 = vmatpush1.msra.mxu0 %v441
          %1258 = vmatprep.subr.mxu0 %v438
          %1259 = vmatpush1.msra.mxu0 %v437
          %1260 = vmatprep.subr.mxu0 %v434
          %1261 = vmatpush1.msra.mxu0 %v433
          %1262 = vmatprep.subr.mxu0 %v430
          %1263 = vmatpush1.msra.mxu0 %v429
          %1264 = vmatprep.subr.mxu0 0.0
          %1265 = vmatpush2.msra.mxu0 0.0
          %1266 = vmatprep.subr.mxu0 0.0
          %1267 = vmatpush2.msra.mxu0 0.0
          %1268 = vmatprep.subr.mxu0 0.0
          %1269 = vmatpush2.msra.mxu0 0.0
          %1270 = vmatprep.subr.mxu0 0.0
          %1271 = vmatpush2.msra.mxu0 0.0
          %1272 = vmatprep.subr.mxu0 0.0
          %1273 = vmatpush2.msra.mxu0 0.0
          %1274 = vmatprep.subr.mxu0 0.0
          %1275 = vmatpush2.msra.mxu0 0.0
          %1276 = vmatprep.subr.mxu0 0.0
          %1277 = vmatpush2.msra.mxu0 0.0
          %1278 = vmatprep.subr.mxu0 0.0
          %1279 = vmatpush2.msra.mxu0 0.0
          %1280 = vmatprep.subr.mxu0 0.0
          %1281 = vmatpush2.msra.mxu0 0.0
          %1282 = vmatprep.subr.mxu0 0.0
          %1283 = vmatpush2.msra.mxu0 0.0
          %1284 = vmatprep.subr.mxu0 0.0
          %1285 = vmatpush2.msra.mxu0 0.0
          %1286 = vmatprep.subr.mxu0 0.0
          %1287 = vmatpush2.msra.mxu0 0.0
          %1288 = vmatprep.subr.mxu0 0.0
          %1289 = vmatpush2.msra.mxu0 0.0
          %1290 = vmatprep.subr.mxu0 0.0
          %1291 = vmatpush2.msra.mxu0 0.0
          %1292 = vmatprep.subr.mxu0 0.0
          %1293 = vmatpush2.msra.mxu0 0.0
          %1294 = vmatprep.subr.mxu0 0.0
          %1295 = vmatpush2.msra.mxu0 0.0
          %1296 = vmatprep.mubr.f32.mxu0 0.0
          %1297 = vmatmul.mubr.f32.gmra.mxu0 %v1065
          %v1298 = vpop.f32.mrf.mxu0
          %v1299 = vadd.f32 %v1073, %v1298
          %v1300 = vpop.f32.mrf.mxu0
          %v1301 = vadd.f32 %v1074, %v1300
          %1302 = vdwg.mxu0
          %v1303 = vxor.u32 %v1228, 2147483648
          %v1304 = vmul.f32 %v1303, 1.442695
          %v1305 = vpow.pop %v1304
          %v1306 = vadd.f32 %v1305, 1.0
          %v1307 = vrcp.pop %v1306
          %v1308 = vmul.f32 1.0, %v1307
          %v1309 = vxor.u32 %v1230, 2147483648
          %v1310 = vmul.f32 %v1309, 1.442695
          %v1311 = vpow.pop %v1310
          %v1312 = vadd.f32 %v1311, 1.0
          %v1313 = vrcp.pop %v1312
          %v1314 = vmul.f32 1.0, %v1313
          %v1315 = vxor.u32 %v1299, 2147483648
          %v1316 = vmul.f32 %v1315, 1.442695
          %v1317 = vpow.pop %v1316
          %v1318 = vadd.f32 %v1317, 1.0
          %v1319 = vrcp.pop %v1318
          %v1320 = vmul.f32 1.0, %v1319
          %v1321 = vxor.u32 %v1301, 2147483648
          %v1322 = vmul.f32 %v1321, 1.442695
          %v1323 = vpow.pop %v1322
          %v1324 = vadd.f32 %v1323, 1.0
          %v1325 = vrcp.pop %v1324
          %v1326 = vmul.f32 1.0, %v1325
          %v1327 = vmul.f32 %v1308, %v1160
          %v1328 = vmul.f32 %v1314, %v1326
          %v1329 = vadd.f32 %v1327, %v1328
          %v1330 = vtanh.pop %v1329
          %v1331 = vmul.f32 %v1320, %v1330
          %1332 = vst [vmem:[#allocation2] sm:$0xff] %v1331
          %1333 = vst [vmem:[#allocation3] sm:$0xff] %v1329
          %v1334 = vpack.c.bf16 %v1320, %v1320
          %s1335 = scalar_lea.vmem %s412, 8 [#allocation13]
          %1336 = vst [vmem:[%s1335] sm:$0xf] %v1334
        $region80: #{tpu_custom_call.1} parent=43 // pred_fallthru
          _
        %s1337 = sadd.s32 %s508, 3
        %p1338 = scmp.lt.s32.totalorder %s1337, 8
        // Predicated region
        $region81: #{tpu_custom_call.1} parent=43 // pred_check
          %p1339 = pneg %p1338
        $region82: #{tpu_custom_call.1} parent=43 // pred_check_branch
          %1341 = sbr.rel (%p1339) target = $region84
        $region83: #{tpu_custom_call.1} parent=43 // pred_region
          %v1342 = vld [vmem:[#allocation2] sm:$0xff]
          %v1343 = vld [vmem:[#allocation3] sm:$0xff]
          %s1344 = scalar_lea.vmem %s368, 60 [#allocation4]
          %v1345 = vld [vmem:[%s1344] sm:$0xff]
          %v1346 = vld [vmem:[%s1344 + $0x8] sm:$0xff]
          %v1347 = vld [vmem:[%s1344 + $0x10] sm:$0xf]
          %v1348 = vunpack.c.l.bf16 %v1345
          %v1349 = vunpack.c.h.bf16 %v1345
          %v1350 = vunpack.c.l.bf16 %v1346
          %v1351 = vunpack.c.h.bf16 %v1346
          %v1352 = vunpack.c.l.bf16 %v1347
          %v1354 = vlaneseq
          %v1355 = vshrl.u32 %v1354, 7
          %v1356 = vsub.s32 0, %v1355
          %v1357 = vrot.slane %v507, %v1356
          %1359 = vmatprep.subr.mxu0 0.0
          %1360 = vmatpush1.msra.mxu0 %v506
          %1361 = vmatprep.subr.mxu0 0.0
          %1362 = vmatpush1.msra.mxu0 %v505
          %1363 = vmatprep.subr.mxu0 0.0
          %1364 = vmatpush1.msra.mxu0 %v504
          %1365 = vmatprep.subr.mxu0 0.0
          %1366 = vmatpush1.msra.mxu0 %v503
          %1367 = vmatprep.subr.mxu0 0.0
          %1368 = vmatpush1.msra.mxu0 %v502
          %1369 = vmatprep.subr.mxu0 0.0
          %1370 = vmatpush1.msra.mxu0 %v501
          %1371 = vmatprep.subr.mxu0 0.0
          %1372 = vmatpush1.msra.mxu0 %v500
          %1373 = vmatprep.subr.mxu0 0.0
          %1374 = vmatpush1.msra.mxu0 %v499
          %1375 = vmatprep.subr.mxu0 0.0
          %1376 = vmatpush1.msra.mxu0 %v498
          %1377 = vmatprep.subr.mxu0 0.0
          %1378 = vmatpush1.msra.mxu0 %v497
          %1379 = vmatprep.subr.mxu0 0.0
          %1380 = vmatpush1.msra.mxu0 %v496
          %1381 = vmatprep.subr.mxu0 0.0
          %1382 = vmatpush1.msra.mxu0 %v495
          %1383 = vmatprep.subr.mxu0 0.0
          %1384 = vmatpush1.msra.mxu0 %v494
          %1385 = vmatprep.subr.mxu0 0.0
          %1386 = vmatpush1.msra.mxu0 %v493
          %1387 = vmatprep.subr.mxu0 0.0
          %1388 = vmatpush1.msra.mxu0 %v492
          %1389 = vmatprep.subr.mxu0 0.0
          %1390 = vmatpush1.msra.mxu0 %v491
          %1391 = vmatprep.subr.mxu0 0.0
          %1392 = vmatpush2.msra.mxu0 0.0
          %1393 = vmatprep.subr.mxu0 0.0
          %1394 = vmatpush2.msra.mxu0 0.0
          %1395 = vmatprep.subr.mxu0 0.0
          %1396 = vmatpush2.msra.mxu0 0.0
          %1397 = vmatprep.subr.mxu0 0.0
          %1398 = vmatpush2.msra.mxu0 0.0
          %1399 = vmatprep.subr.mxu0 0.0
          %1400 = vmatpush2.msra.mxu0 0.0
          %1401 = vmatprep.subr.mxu0 0.0
          %1402 = vmatpush2.msra.mxu0 0.0
          %1403 = vmatprep.subr.mxu0 0.0
          %1404 = vmatpush2.msra.mxu0 0.0
          %1405 = vmatprep.subr.mxu0 0.0
          %1406 = vmatpush2.msra.mxu0 0.0
          %1407 = vmatprep.subr.mxu0 0.0
          %1408 = vmatpush2.msra.mxu0 0.0
          %1409 = vmatprep.subr.mxu0 0.0
          %1410 = vmatpush2.msra.mxu0 0.0
          %1411 = vmatprep.subr.mxu0 0.0
          %1412 = vmatpush2.msra.mxu0 0.0
          %1413 = vmatprep.subr.mxu0 0.0
          %1414 = vmatpush2.msra.mxu0 0.0
          %1415 = vmatprep.subr.mxu0 0.0
          %1416 = vmatpush2.msra.mxu0 0.0
          %1417 = vmatprep.subr.mxu0 0.0
          %1418 = vmatpush2.msra.mxu0 0.0
          %1419 = vmatprep.subr.mxu0 0.0
          %1420 = vmatpush2.msra.mxu0 0.0
          %1421 = vmatprep.subr.mxu0 0.0
          %1422 = vmatpush2.msra.mxu0 0.0
          %1423 = vmatprep.mubr.f32.mxu0 0.0
          %1424 = vmatmul.mubr.f32.gmra.mxu0 %v1343
          %v1425 = vpop.f32.mrf.mxu0
          %v1426 = vadd.f32 %v1357, %v1425
          %v1427 = vpop.f32.mrf.mxu0
          %1428 = vdwg.mxu0
          %v1429 = vtanh.pop %v1426
          %v1430 = vsub.f32 %v1352, 1.0
          %1432 = vset.pattern.permute.xlu0 0
          %1433 = vperm.xlu0 %1432, %v1430
          %v1434 = vpop.permute.xlu0 %1433
          %v1436 = vmul.f32 %v1429, %v1434
          %v1437 = vadd.f32 %v1343, %v1436
          %1438 = vmatprep.subr.mxu0 %v488
          %1439 = vmatpush1.msra.mxu0 %v487
          %1440 = vmatprep.subr.mxu0 %v484
          %1441 = vmatpush1.msra.mxu0 %v483
          %1442 = vmatprep.subr.mxu0 %v480
          %1443 = vmatpush1.msra.mxu0 %v479
          %1444 = vmatprep.subr.mxu0 %v476
          %1445 = vmatpush1.msra.mxu0 %v475
          %1446 = vmatprep.subr.mxu0 %v472
          %1447 = vmatpush1.msra.mxu0 %v471
          %1448 = vmatprep.subr.mxu0 %v468
          %1449 = vmatpush1.msra.mxu0 %v467
          %1450 = vmatprep.subr.mxu0 %v464
          %1451 = vmatpush1.msra.mxu0 %v463
          %1452 = vmatprep.subr.mxu0 %v460
          %1453 = vmatpush1.msra.mxu0 %v459
          %1454 = vmatprep.subr.mxu0 %v456
          %1455 = vmatpush1.msra.mxu0 %v455
          %1456 = vmatprep.subr.mxu0 %v452
          %1457 = vmatpush1.msra.mxu0 %v451
          %1458 = vmatprep.subr.mxu0 %v448
          %1459 = vmatpush1.msra.mxu0 %v447
          %1460 = vmatprep.subr.mxu0 %v444
          %1461 = vmatpush1.msra.mxu0 %v443
          %1462 = vmatprep.subr.mxu0 %v440
          %1463 = vmatpush1.msra.mxu0 %v439
          %1464 = vmatprep.subr.mxu0 %v436
          %1465 = vmatpush1.msra.mxu0 %v435
          %1466 = vmatprep.subr.mxu0 %v432
          %1467 = vmatpush1.msra.mxu0 %v431
          %1468 = vmatprep.subr.mxu0 %v428
          %1469 = vmatpush1.msra.mxu0 %v427
          %1470 = vmatprep.subr.mxu0 0.0
          %1471 = vmatpush2.msra.mxu0 0.0
          %1472 = vmatprep.subr.mxu0 0.0
          %1473 = vmatpush2.msra.mxu0 0.0
          %1474 = vmatprep.subr.mxu0 0.0
          %1475 = vmatpush2.msra.mxu0 0.0
          %1476 = vmatprep.subr.mxu0 0.0
          %1477 = vmatpush2.msra.mxu0 0.0
          %1478 = vmatprep.subr.mxu0 0.0
          %1479 = vmatpush2.msra.mxu0 0.0
          %1480 = vmatprep.subr.mxu0 0.0
          %1481 = vmatpush2.msra.mxu0 0.0
          %1482 = vmatprep.subr.mxu0 0.0
          %1483 = vmatpush2.msra.mxu0 0.0
          %1484 = vmatprep.subr.mxu0 0.0
          %1485 = vmatpush2.msra.mxu0 0.0
          %1486 = vmatprep.subr.mxu0 0.0
          %1487 = vmatpush2.msra.mxu0 0.0
          %1488 = vmatprep.subr.mxu0 0.0
          %1489 = vmatpush2.msra.mxu0 0.0
          %1490 = vmatprep.subr.mxu0 0.0
          %1491 = vmatpush2.msra.mxu0 0.0
          %1492 = vmatprep.subr.mxu0 0.0
          %1493 = vmatpush2.msra.mxu0 0.0
          %1494 = vmatprep.subr.mxu0 0.0
          %1495 = vmatpush2.msra.mxu0 0.0
          %1496 = vmatprep.subr.mxu0 0.0
          %1497 = vmatpush2.msra.mxu0 0.0
          %1498 = vmatprep.subr.mxu0 0.0
          %1499 = vmatpush2.msra.mxu0 0.0
          %1500 = vmatprep.subr.mxu0 0.0
          %1501 = vmatpush2.msra.mxu0 0.0
          %1502 = vmatprep.mubr.f32.mxu0 0.0
          %1503 = vmatmul.mubr.f32.gmra.mxu0 %v1342
          %v1504 = vpop.f32.mrf.mxu0
          %v1505 = vadd.f32 %v1348, %v1504
          %v1506 = vpop.f32.mrf.mxu0
          %v1507 = vadd.f32 %v1349, %v1506
          %1508 = vdwg.mxu0
          %1509 = vmatprep.subr.mxu0 %v490
          %1510 = vmatpush1.msra.mxu0 %v489
          %1511 = vmatprep.subr.mxu0 %v486
          %1512 = vmatpush1.msra.mxu0 %v485
          %1513 = vmatprep.subr.mxu0 %v482
          %1514 = vmatpush1.msra.mxu0 %v481
          %1515 = vmatprep.subr.mxu0 %v478
          %1516 = vmatpush1.msra.mxu0 %v477
          %1517 = vmatprep.subr.mxu0 %v474
          %1518 = vmatpush1.msra.mxu0 %v473
          %1519 = vmatprep.subr.mxu0 %v470
          %1520 = vmatpush1.msra.mxu0 %v469
          %1521 = vmatprep.subr.mxu0 %v466
          %1522 = vmatpush1.msra.mxu0 %v465
          %1523 = vmatprep.subr.mxu0 %v462
          %1524 = vmatpush1.msra.mxu0 %v461
          %1525 = vmatprep.subr.mxu0 %v458
          %1526 = vmatpush1.msra.mxu0 %v457
          %1527 = vmatprep.subr.mxu0 %v454
          %1528 = vmatpush1.msra.mxu0 %v453
          %1529 = vmatprep.subr.mxu0 %v450
          %1530 = vmatpush1.msra.mxu0 %v449
          %1531 = vmatprep.subr.mxu0 %v446
          %1532 = vmatpush1.msra.mxu0 %v445
          %1533 = vmatprep.subr.mxu0 %v442
          %1534 = vmatpush1.msra.mxu0 %v441
          %1535 = vmatprep.subr.mxu0 %v438
          %1536 = vmatpush1.msra.mxu0 %v437
          %1537 = vmatprep.subr.mxu0 %v434
          %1538 = vmatpush1.msra.mxu0 %v433
          %1539 = vmatprep.subr.mxu0 %v430
          %1540 = vmatpush1.msra.mxu0 %v429
          %1541 = vmatprep.subr.mxu0 0.0
          %1542 = vmatpush2.msra.mxu0 0.0
          %1543 = vmatprep.subr.mxu0 0.0
          %1544 = vmatpush2.msra.mxu0 0.0
          %1545 = vmatprep.subr.mxu0 0.0
          %1546 = vmatpush2.msra.mxu0 0.0
          %1547 = vmatprep.subr.mxu0 0.0
          %1548 = vmatpush2.msra.mxu0 0.0
          %1549 = vmatprep.subr.mxu0 0.0
          %1550 = vmatpush2.msra.mxu0 0.0
          %1551 = vmatprep.subr.mxu0 0.0
          %1552 = vmatpush2.msra.mxu0 0.0
          %1553 = vmatprep.subr.mxu0 0.0
          %1554 = vmatpush2.msra.mxu0 0.0
          %1555 = vmatprep.subr.mxu0 0.0
          %1556 = vmatpush2.msra.mxu0 0.0
          %1557 = vmatprep.subr.mxu0 0.0
          %1558 = vmatpush2.msra.mxu0 0.0
          %1559 = vmatprep.subr.mxu0 0.0
          %1560 = vmatpush2.msra.mxu0 0.0
          %1561 = vmatprep.subr.mxu0 0.0
          %1562 = vmatpush2.msra.mxu0 0.0
          %1563 = vmatprep.subr.mxu0 0.0
          %1564 = vmatpush2.msra.mxu0 0.0
          %1565 = vmatprep.subr.mxu0 0.0
          %1566 = vmatpush2.msra.mxu0 0.0
          %1567 = vmatprep.subr.mxu0 0.0
          %1568 = vmatpush2.msra.mxu0 0.0
          %1569 = vmatprep.subr.mxu0 0.0
          %1570 = vmatpush2.msra.mxu0 0.0
          %1571 = vmatprep.subr.mxu0 0.0
          %1572 = vmatpush2.msra.mxu0 0.0
          %1573 = vmatprep.mubr.f32.mxu0 0.0
          %1574 = vmatmul.mubr.f32.gmra.mxu0 %v1342
          %v1575 = vpop.f32.mrf.mxu0
          %v1576 = vadd.f32 %v1350, %v1575
          %v1577 = vpop.f32.mrf.mxu0
          %v1578 = vadd.f32 %v1351, %v1577
          %1579 = vdwg.mxu0
          %v1580 = vxor.u32 %v1505, 2147483648
          %v1581 = vmul.f32 %v1580, 1.442695
          %v1582 = vpow.pop %v1581
          %v1583 = vadd.f32 %v1582, 1.0
          %v1584 = vrcp.pop %v1583
          %v1585 = vmul.f32 1.0, %v1584
          %v1586 = vxor.u32 %v1507, 2147483648
          %v1587 = vmul.f32 %v1586, 1.442695
          %v1588 = vpow.pop %v1587
          %v1589 = vadd.f32 %v1588, 1.0
          %v1590 = vrcp.pop %v1589
          %v1591 = vmul.f32 1.0, %v1590
          %v1592 = vxor.u32 %v1576, 2147483648
          %v1593 = vmul.f32 %v1592, 1.442695
          %v1594 = vpow.pop %v1593
          %v1595 = vadd.f32 %v1594, 1.0
          %v1596 = vrcp.pop %v1595
          %v1597 = vmul.f32 1.0, %v1596
          %v1598 = vxor.u32 %v1578, 2147483648
          %v1599 = vmul.f32 %v1598, 1.442695
          %v1600 = vpow.pop %v1599
          %v1601 = vadd.f32 %v1600, 1.0
          %v1602 = vrcp.pop %v1601
          %v1603 = vmul.f32 1.0, %v1602
          %v1604 = vmul.f32 %v1585, %v1437
          %v1605 = vmul.f32 %v1591, %v1603
          %v1606 = vadd.f32 %v1604, %v1605
          %v1607 = vtanh.pop %v1606
          %v1608 = vmul.f32 %v1597, %v1607
          %1609 = vst [vmem:[#allocation2] sm:$0xff] %v1608
          %1610 = vst [vmem:[#allocation3] sm:$0xff] %v1606
          %v1611 = vpack.c.bf16 %v1597, %v1597
          %s1612 = scalar_lea.vmem %s412, 12 [#allocation13]
          %1613 = vst [vmem:[%s1612] sm:$0xf] %v1611
        $region84: #{tpu_custom_call.1} parent=43 // pred_fallthru
          _
        %p1614 = scmp.eq.s32.totalorder %s34, 1
        // Predicated region
        $region85: #{tpu_custom_call.1} parent=43 // pred_check
          %p1615 = pneg %p1614
        $region86: #{tpu_custom_call.1} parent=43 // pred_check_branch
          %1617 = sbr.rel (%p1615) target = $region88
        $region87: #{tpu_custom_call.1} parent=43 // pred_region
          %v1618 = vld [vmem:[#allocation2] sm:$0xff]
          %1619 = vst [vmem:[#allocation14] sm:$0xff] %v1618
          %v1620 = vld [vmem:[#allocation3] sm:$0xff]
          %1621 = vst [vmem:[#allocation16] sm:$0xff] %v1620
        $region88: #{tpu_custom_call.1} parent=43 // pred_fallthru
          _
        %s1622 = sand.u32 %s194, 1
        %s1623 = scalar_lea.sflag [#allocation6], %s1622
        %s1624 = sand.u32 %s194, 1
        %s1625 = smul.addr %s1624, 16
        %s1626 = scalar_lea.vmem [#allocation13], %s1625
        // Predicated region
        $region89: #{tpu_custom_call.1} parent=43 // pred_check
          %p1627 = pneg %p204
        $region90: #{tpu_custom_call.1} parent=43 // pred_check_branch
          %1629 = sbr.rel (%p1627) target = $region92
        $region91: #{tpu_custom_call.1} parent=43 // pred_region
          %s1630 = smul.u32 4, %s34
          %s1632 = ssub.s32 256, 256
          %1633 = vsyncadd %s1623, %s1632
          %s1634 = sadd.s32 %s33, %s1630
          %s1635 = smul.addr %s1634, 64
          %s1636 = scalar_lea.hbm %s6, %s1635
          %s1637 = sshll.u32 %s1626, 4
          %s1638 = int_to_ptr.vmem [resolvable:$true] %s1637
          %1643 = dma.vmem_to_hbm [thread:$0]  %s1638, 256, %s1636, %s1623, 64, 64, 4
        $region92: #{tpu_custom_call.1} parent=43 // pred_fallthru
          _
        // Predicated region
        $region93: #{tpu_custom_call.1} parent=43 // pred_check
          %p1644 = pneg %p230
        $region94: #{tpu_custom_call.1} parent=43 // pred_check_branch
          %1646 = sbr.rel (%p1644) target = $region96
        $region95: #{tpu_custom_call.1} parent=43 // pred_region
          %s1648 = ssub.s32 128, 128
          %1649 = vsyncadd [#allocation15], %s1648
          %s1650 = smul.addr %s33, 128
          %s1651 = scalar_lea.hbm %s7, %s1650
          %s1653 = sshll.u32 [#allocation14], 4
          %s1654 = int_to_ptr.vmem [resolvable:$true] %s1653
          %1656 = dma.vmem_to_hbm [thread:$0]  %s1654, 128, %s1651, [#allocation15]
        $region96: #{tpu_custom_call.1} parent=43 // pred_fallthru
          _
        // Predicated region
        $region97: #{tpu_custom_call.1} parent=43 // pred_check
          %p1657 = pneg %p256
        $region98: #{tpu_custom_call.1} parent=43 // pred_check_branch
          %1659 = sbr.rel (%p1657) target = $region100
        $region99: #{tpu_custom_call.1} parent=43 // pred_region
          %s1661 = ssub.s32 128, 128
          %1662 = vsyncadd [#allocation15], %s1661
          %s1663 = smul.addr %s33, 128
          %s1664 = scalar_lea.hbm %s8, %s1663
          %s1666 = sshll.u32 [#allocation16], 4
          %s1667 = int_to_ptr.vmem [resolvable:$true] %s1666
          %1669 = dma.vmem_to_hbm [thread:$0]  %s1667, 128, %s1664, [#allocation15]
        $region100: #{tpu_custom_call.1} parent=43 // pred_fallthru
          _
        // Predicated region
        $region101: #{tpu_custom_call.1} parent=43 // pred_check
          %p1670 = pneg %p230
        $region102: #{tpu_custom_call.1} parent=43 // pred_check_branch
          %1672 = sbr.rel (%p1670) target = $region104
        $region103: #{tpu_custom_call.1} parent=43 // pred_region
          %1673 = dma.done [#allocation15], 128
        $region104: #{tpu_custom_call.1} parent=43 // pred_fallthru
          _
        // Predicated region
        $region105: #{tpu_custom_call.1} parent=43 // pred_check
          %p1674 = pneg %p256
        $region106: #{tpu_custom_call.1} parent=43 // pred_check_branch
          %1676 = sbr.rel (%p1674) target = $region108
        $region107: #{tpu_custom_call.1} parent=43 // pred_region
          %1677 = dma.done [#allocation15], 128
        $region108: #{tpu_custom_call.1} parent=43 // pred_fallthru
          _
      $region44: #{tpu_custom_call.1} parent=5 // pred_fallthru
        _
      %p1678 = scmp.le.s32.totalorder 2, %s24
      // Predicated region
      $region109: #{tpu_custom_call.1} parent=5 // pred_check
        %p1679 = pneg %p1678
      $region110: #{tpu_custom_call.1} parent=5 // pred_check_branch
        %1681 = sbr.rel (%p1679) target = $region112
      $region111: #{tpu_custom_call.1} parent=5 // pred_region
        %s1682 = ssub.s32 %s24, 2
        // Predicated region
        $region113: #{tpu_custom_call.1} parent=111 // pred_check
          %p1683 = pneg %p210
        $region114: #{tpu_custom_call.1} parent=111 // pred_check_branch
          %1685 = sbr.rel (%p1683) target = $region116
        $region115: #{tpu_custom_call.1} parent=111 // pred_region
          %s1686 = sand.u32 %s195, 1
          %s1687 = scalar_lea.sflag [#allocation6], %s1686
          %s1688 = sand.u32 %s195, 1
          %s1689 = smul.addr %s1688, 16
          %s1690 = scalar_lea.vmem [#allocation13], %s1689
          %1691 = dma.done %s1687, 256
        $region116: #{tpu_custom_call.1} parent=111 // pred_fallthru
          _
      $region112: #{tpu_custom_call.1} parent=5 // pred_fallthru
        _
    $region6: #{tpu_custom_call.1} parent=1 // loop_footer
      %s28 = sadd.s32 1, %s24
    $region7: #{tpu_custom_call.1} parent=1 // loop_footer_branch
      %23 = sbr.rel target = $region3
    $region8: #{tpu_custom_call.1} parent=1 // loop_exit
      _
    %1692 = vsyncpa [#allocation5], 1
    %s1693 = scalar_lea.sflag [#allocation5], 1
    %1694 = vsyncpa %s1693, 1
    %1695 = vsyncpa [#allocation8], 1
    %1696 = vsyncpa [#allocation11], 1
    %1697 = vsyncpa [#allocation6], 1
    %s1698 = scalar_lea.sflag [#allocation6], 1
    %1699 = vsyncpa %s1698, 1
    %1700 = vsyncpa [#allocation15], 1

</llo_original>
